<compile_context>
chip_gen: v6e
topology: v6e:2x2x1
jax: 0.10.0
libtpu: 0.0.40
codegen_flags: <defaults>
</compile_context>

<pallas_src>
import functools

import jax
import jax.numpy as jnp
from jax import lax
from jax.experimental import pallas as pl
from jax.experimental.pallas import tpu as pltpu

K = 7        # conv kernel size
PAD = 3      # conv padding (same-size output)


def _tree_sum(xs):
    """Log-depth sum of a list of arrays (keeps VALU chains short)."""
    xs = list(xs)
    while len(xs) > 1:
        nxt = [xs[i] + xs[i + 1] for i in range(0, len(xs) - 1, 2)]
        if len(xs) % 2:
            nxt.append(xs[-1])
        xs = nxt
    return xs[0]


def _spatial_attention_kernel(x_ref, rmask_ref, cmask_ref, w_ref, b_ref,
                              o_ref, sum_ref, max_ref, *, C, tc, H, W):
    # x_ref     : (tc, H*W)  VMEM  -- one channel tile of one batch element
    # rmask_ref : (K, H*W)   VMEM  -- f32 {0,1} row-validity mask per kh
    # cmask_ref : (K, H*W)   VMEM  -- f32 {0,1} col-validity mask per kw
    # w_ref     : (2*K*K,)   SMEM  -- flat conv weight [avg(*1/C) | max], [kh][kw]
    # b_ref     : (1,)       SMEM  -- conv bias
    # o_ref     : (1, H*W)   VMEM  -- lane-dense output block
    # sum_ref/max_ref : (1, H*W) f32 VMEM -- running channel sum / max
    HW = H * W
    ci = pl.program_id(1)
    n_c = pl.num_programs(1)

    x = x_ref[...].astype(jnp.float32)                       # (tc, HW)
    if C % tc != 0:
        # Ragged channel tail: mask out-of-range channels of the last block.
        ch = ci * tc + lax.broadcasted_iota(jnp.int32, (tc, HW), 0)
        valid = ch < C
        x_sum_in = jnp.where(valid, x, 0.0)
        x_max_in = jnp.where(valid, x, -jnp.inf)
    else:
        x_sum_in = x
        x_max_in = x
    part_sum = jnp.sum(x_sum_in, axis=0, keepdims=True)      # (1, HW)
    part_max = jnp.max(x_max_in, axis=0, keepdims=True)      # (1, HW)

    @pl.when(ci == 0)
    def _init():
        sum_ref[...] = part_sum
        max_ref[...] = part_max

    @pl.when(ci != 0)
    def _accumulate():
        sum_ref[...] = sum_ref[...] + part_sum
        max_ref[...] = jnp.maximum(max_ref[...], part_max)

    @pl.when(ci == n_c - 1)
    def _finalize():
        # 7x7 zero-padded conv over [avg, max] in the flattened spatial domain.
        def shifted(v, s):
            # out[i] = v[(i + s) mod HW]; static lane rotation (XLU).
            sh = (-s) % HW
            return v if sh == 0 else pltpu.roll(v, sh, axis=1)

        def conv_one(m, w_base):
            # Column (kw) taps once: lane shift by dw, zeroed at left/right
            # borders via the precomputed column mask.
            cols = []
            for kw in range(K):
                dw = kw - PAD
                cols.append(cmask_ref[kw:kw + 1, :] * shifted(m, dw))
            # Row (kh) taps: weighted column sums, lane shift by dh*W, zeroed
            # at the top/bottom borders via the row mask.
            outs = []
            for kh in range(K):
                dh = kh - PAD
                inner = _tree_sum([w_ref[w_base + kh * K + kw] * cols[kw]
                                   for kw in range(K)])
                outs.append(rmask_ref[kh:kh + 1, :] * shifted(inner, dh * W))
            return _tree_sum(outs)

        avg_part = conv_one(sum_ref[...], 0)          # 1/C folded into weights
        max_part = conv_one(max_ref[...], K * K)
        acc = avg_part + max_part + b_ref[0]
        o_ref[...] = jax.nn.sigmoid(acc).astype(o_ref.dtype)


def _vmem_limits():
    """(per-block budget, vmem_limit_bytes), generation-aware with safe fallback."""
    vmem_cap = 64 << 20
    try:
        info = pltpu.get_tpu_info()
        vmem_cap = int(getattr(info, "vmem_capacity_bytes", vmem_cap))
    except Exception:
        pass
    if vmem_cap >= (96 << 20):      # v5e / v6e: 128 MiB VMEM
        return 32 << 20, 64 << 20
    # v7x (64 MiB) or unknown: stay conservative.
    return 16 << 20, 48 << 20


def _pick_channel_tile(C, HW, itemsize, budget_bytes):
    """Largest channel tile whose double-buffered (tc, HW) block fits budget."""
    lane_bytes = (-(-HW // 128)) * 128 * itemsize     # lane dim padded to 128
    cap = max(1, budget_bytes // (2 * lane_bytes))    # channels per block
    if cap >= C:
        return C
    return min(C, max(8, (cap // 8) * 8))             # keep sublane-aligned


def spatial_attention(x, weight, bias):
    """x: (B, C, H, W); weight: (1, 2, 7, 7); bias: (1,) -> (B, 1, H, W)."""
    B, C, H, W = x.shape
    HW = H * W
    x_flat = x.reshape(B, C, HW)                      # free for contiguous NCHW

    budget, vmem_limit = _vmem_limits()
    itemsize = jnp.dtype(x.dtype).itemsize
    tc = _pick_channel_tile(C, HW, itemsize, budget)
    n_c = (C + tc - 1) // tc                          # reduction grid (cdiv)

    # Fold the 1/C of the channel mean into the avg-branch conv weights.
    w_avg = weight[0, 0].reshape(-1).astype(jnp.float32) * (1.0 / C)
    w_max = weight[0, 1].reshape(-1).astype(jnp.float32)
    w_flat = jnp.concatenate([w_avg, w_max])          # (2*K*K,)
    b = bias.astype(jnp.float32).reshape(1)           # (1,)

    # Precomputed {0,1} border masks (avoid in-kernel div/mod for row/col).
    rows = jnp.repeat(jnp.arange(H, dtype=jnp.int32), W)    # (HW,)
    cols = jnp.tile(jnp.arange(W, dtype=jnp.int32), H)      # (HW,)
    d = (jnp.arange(K, dtype=jnp.int32) - PAD)[:, None]     # (K, 1)
    row_mask = ((rows[None, :] + d >= 0) &
                (rows[None, :] + d < H)).astype(jnp.float32)   # (K, HW)
    col_mask = ((cols[None, :] + d >= 0) &
                (cols[None, :] + d < W)).astype(jnp.float32)   # (K, HW)

    grid_spec = pltpu.PrefetchScalarGridSpec(
        num_scalar_prefetch=0,
        grid=(B, n_c),                                # reduction axis last
        in_specs=[
            pl.BlockSpec((None, tc, HW), lambda bi, ci: (bi, ci, 0)),
            pl.BlockSpec((K, HW), lambda bi, ci: (0, 0)),
            pl.BlockSpec((K, HW), lambda bi, ci: (0, 0)),
            pl.BlockSpec(memory_space=pltpu.MemorySpace.SMEM),
            pl.BlockSpec(memory_space=pltpu.MemorySpace.SMEM),
        ],
        out_specs=pl.BlockSpec((None, 1, HW), lambda bi, ci: (bi, 0, 0)),
        scratch_shapes=[
            pltpu.VMEM((1, HW), jnp.float32),         # running channel sum
            pltpu.VMEM((1, HW), jnp.float32),         # running channel max
        ],
    )

    out_flat = pl.pallas_call(
        functools.partial(_spatial_attention_kernel, C=C, tc=tc, H=H, W=W),
        out_shape=jax.ShapeDtypeStruct((B, 1, HW), x.dtype),
        grid_spec=grid_spec,
        compiler_params=pltpu.CompilerParams(
            dimension_semantics=("parallel", "arbitrary"),
            vmem_limit_bytes=vmem_limit,
        ),
    )(x_flat, row_mask, col_mask, w_flat, b)
    return out_flat.reshape(B, 1, H, W)


def _reference(x, weight, bias):
    """Pure-JAX reference matching the PyTorch forward."""
    avg = jnp.mean(x, axis=1, keepdims=True)
    mx = jnp.max(x, axis=1, keepdims=True)
    cat = jnp.concatenate([avg, mx], axis=1)          # (B, 2, H, W)
    y = lax.conv_general_dilated(
        cat, weight, window_strides=(1, 1),
        padding=((PAD, PAD), (PAD, PAD)),
        dimension_numbers=("NCHW", "OIHW", "NCHW"))
    y = y + bias.reshape(1, 1, 1, 1)
    return jax.nn.sigmoid(y)


if __name__ == "__main__":
    B, C, H, W = 2, 4, 16, 16
    key = jax.random.PRNGKey(0)
    kx, kwt, kb = jax.random.split(key, 3)

    x = jax.random.normal(kx, (B, C, H, W), dtype=jnp.float32)

    # Deterministic conv params: Conv2d(2, 1, 7) -> weight (1, 2, 7, 7), bias (1,)
    fan_in = 2 * K * K
    bound = 1.0 / (fan_in ** 0.5)
    weight = jax.random.uniform(kwt, (1, 2, K, K), jnp.float32, -bound, bound)
    bias = jax.random.uniform(kb, (1,), jnp.float32, -bound, bound)

    out = spatial_attention(x, weight, bias)
    out = jax.block_until_ready(out)

    ref = _reference(x, weight, bias)
    assert out.shape == (B, 1, H, W)
    assert jnp.allclose(out, ref, atol=2e-5, rtol=2e-5), (
        f"max abs diff {float(jnp.max(jnp.abs(out - ref)))}")

    print("KERNEL_OK")
</pallas_src>

<mosaic_0001>
module attributes {stable_mosaic.version = 11 : i64} {
  func.func @_spatial_attention_kernel(%arg0: i32, %arg1: i32, %arg2: memref<1x4x256xf32, #tpu.memory_space<vmem>>, %arg3: memref<7x256xf32, #tpu.memory_space<vmem>>, %arg4: memref<7x256xf32, #tpu.memory_space<vmem>>, %arg5: memref<98xf32, #tpu.memory_space<smem>>, %arg6: memref<1xf32, #tpu.memory_space<smem>>, %arg7: memref<1x1x256xf32, #tpu.memory_space<vmem>>, %arg8: memref<1x256xf32, #tpu.memory_space<vmem>>, %arg9: memref<1x256xf32, #tpu.memory_space<vmem>>) attributes {dimension_semantics = [#tpu.dimension_semantics<parallel>, #tpu.dimension_semantics<arbitrary>], iteration_bounds = array<i64: 2, 1>, scalar_prefetch = 0 : i64, scratch_operands = 2 : i64, tpu.core_type = #tpu.core_type<tc>, window_params = [{transform_indices = @transform_0, window_bounds = array<i64: 1, 4, 256>}, {pipeline_mode = #tpu.pipeline_mode<synchronous>, transform_indices = @transform_1, window_bounds = array<i64: 7, 256>}, {pipeline_mode = #tpu.pipeline_mode<synchronous>, transform_indices = @transform_2, window_bounds = array<i64: 7, 256>}, {transform_indices = @transform_3, window_bounds = array<i64: 98>}, {transform_indices = @transform_4, window_bounds = array<i64: 1>}, {transform_indices = @transform_5, window_bounds = array<i64: 1, 1, 256>}]} {
    %c0 = arith.constant 0 : index
    %c0_0 = arith.constant 0 : index
    %c0_1 = arith.constant 0 : index
    %0 = vector.load %arg2[%c0, %c0_0, %c0_1] : memref<1x4x256xf32, #tpu.memory_space<vmem>>, vector<1x4x256xf32>
    %1 = vector.shape_cast %0 : vector<1x4x256xf32> to vector<4x256xf32>
    %cst = arith.constant dense<0.000000e+00> : vector<256xf32>
    %2 = vector.multi_reduction <add>, %1, %cst [0] : vector<4x256xf32> to vector<256xf32>
    %3 = vector.shape_cast %2 : vector<256xf32> to vector<1x256xf32>
    %cst_2 = arith.constant dense<0xFF800000> : vector<256xf32>
    %4 = vector.multi_reduction <maximumf>, %1, %cst_2 [0] : vector<4x256xf32> to vector<256xf32>
    %5 = vector.shape_cast %4 : vector<256xf32> to vector<1x256xf32>
    %c0_i32 = arith.constant 0 : i32
    %6 = arith.cmpi eq, %arg1, %c0_i32 : i32
    %7 = arith.extui %6 : i1 to i32
    %c0_i32_3 = arith.constant 0 : i32
    %8 = arith.cmpi ne, %7, %c0_i32_3 : i32
    scf.if %8 {
      %c0_8 = arith.constant 0 : index
      %c0_9 = arith.constant 0 : index
      %15 = vector.load %arg8[%c0_8, %c0_9] : memref<1x256xf32, #tpu.memory_space<vmem>>, vector<1x256xf32>
      tpu.vector_store %arg8[%c0_8, %c0_9], %3 {strides = array<i32>} : memref<1x256xf32, #tpu.memory_space<vmem>>, vector<1x256xf32>,
      %c0_10 = arith.constant 0 : index
      %c0_11 = arith.constant 0 : index
      %16 = vector.load %arg9[%c0_10, %c0_11] : memref<1x256xf32, #tpu.memory_space<vmem>>, vector<1x256xf32>
      tpu.vector_store %arg9[%c0_10, %c0_11], %5 {strides = array<i32>} : memref<1x256xf32, #tpu.memory_space<vmem>>, vector<1x256xf32>,
    } else {
    }
    %c0_i32_4 = arith.constant 0 : i32
    %9 = arith.cmpi ne, %arg1, %c0_i32_4 : i32
    %10 = arith.extui %9 : i1 to i32
    %c0_i32_5 = arith.constant 0 : i32
    %11 = arith.cmpi ne, %10, %c0_i32_5 : i32
    scf.if %11 {
      %c0_8 = arith.constant 0 : index
      %c0_9 = arith.constant 0 : index
      %15 = vector.load %arg8[%c0_8, %c0_9] : memref<1x256xf32, #tpu.memory_space<vmem>>, vector<1x256xf32>
      %16 = arith.addf %15, %3 : vector<1x256xf32>
      %c0_10 = arith.constant 0 : index
      %c0_11 = arith.constant 0 : index
      %17 = vector.load %arg8[%c0_10, %c0_11] : memref<1x256xf32, #tpu.memory_space<vmem>>, vector<1x256xf32>
      tpu.vector_store %arg8[%c0_10, %c0_11], %16 {strides = array<i32>} : memref<1x256xf32, #tpu.memory_space<vmem>>, vector<1x256xf32>,
      %c0_12 = arith.constant 0 : index
      %c0_13 = arith.constant 0 : index
      %18 = vector.load %arg9[%c0_12, %c0_13] : memref<1x256xf32, #tpu.memory_space<vmem>>, vector<1x256xf32>
      %19 = arith.maximumf %18, %5 : vector<1x256xf32>
      %c0_14 = arith.constant 0 : index
      %c0_15 = arith.constant 0 : index
      %20 = vector.load %arg9[%c0_14, %c0_15] : memref<1x256xf32, #tpu.memory_space<vmem>>, vector<1x256xf32>
      tpu.vector_store %arg9[%c0_14, %c0_15], %19 {strides = array<i32>} : memref<1x256xf32, #tpu.memory_space<vmem>>, vector<1x256xf32>,
    } else {
    }
    %c0_i32_6 = arith.constant 0 : i32
    %12 = arith.cmpi eq, %arg1, %c0_i32_6 : i32
    %13 = arith.extui %12 : i1 to i32
    %c0_i32_7 = arith.constant 0 : i32
    %14 = arith.cmpi ne, %13, %c0_i32_7 : i32
    scf.if %14 {
      %c0_8 = arith.constant 0 : index
      %c0_9 = arith.constant 0 : index
      %15 = vector.load %arg8[%c0_8, %c0_9] : memref<1x256xf32, #tpu.memory_space<vmem>>, vector<1x256xf32>
      %c0_10 = arith.constant 0 : index
      %c0_11 = arith.constant 0 : index
      %16 = vector.load %arg4[%c0_10, %c0_11] : memref<7x256xf32, #tpu.memory_space<vmem>>, vector<1x256xf32>
      %c3_i32 = arith.constant 3 : i32
      %17 = tpu.dynamic_rotate %15 by %c3_i32 dim 1 : vector<1x256xf32>, i32 -> vector<1x256xf32>
      %18 = arith.mulf %16, %17 : vector<1x256xf32>
      %c1 = arith.constant 1 : index
      %c0_12 = arith.constant 0 : index
      %19 = vector.load %arg4[%c1, %c0_12] : memref<7x256xf32, #tpu.memory_space<vmem>>, vector<1x256xf32>
      %c2_i32 = arith.constant 2 : i32
      %20 = tpu.dynamic_rotate %15 by %c2_i32 dim 1 : vector<1x256xf32>, i32 -> vector<1x256xf32>
      %21 = arith.mulf %19, %20 : vector<1x256xf32>
      %c2 = arith.constant 2 : index
      %c0_13 = arith.constant 0 : index
      %22 = vector.load %arg4[%c2, %c0_13] : memref<7x256xf32, #tpu.memory_space<vmem>>, vector<1x256xf32>
      %c1_i32 = arith.constant 1 : i32
      %23 = tpu.dynamic_rotate %15 by %c1_i32 dim 1 : vector<1x256xf32>, i32 -> vector<1x256xf32>
      %24 = arith.mulf %22, %23 : vector<1x256xf32>
      %c3 = arith.constant 3 : index
      %c0_14 = arith.constant 0 : index
      %25 = vector.load %arg4[%c3, %c0_14] : memref<7x256xf32, #tpu.memory_space<vmem>>, vector<1x256xf32>
      %26 = arith.mulf %25, %15 : vector<1x256xf32>
      %c4 = arith.constant 4 : index
      %c0_15 = arith.constant 0 : index
      %27 = vector.load %arg4[%c4, %c0_15] : memref<7x256xf32, #tpu.memory_space<vmem>>, vector<1x256xf32>
      %c255_i32 = arith.constant 255 : i32
      %28 = tpu.dynamic_rotate %15 by %c255_i32 dim 1 : vector<1x256xf32>, i32 -> vector<1x256xf32>
      %29 = arith.mulf %27, %28 : vector<1x256xf32>
      %c5 = arith.constant 5 : index
      %c0_16 = arith.constant 0 : index
      %30 = vector.load %arg4[%c5, %c0_16] : memref<7x256xf32, #tpu.memory_space<vmem>>, vector<1x256xf32>
      %c254_i32 = arith.constant 254 : i32
      %31 = tpu.dynamic_rotate %15 by %c254_i32 dim 1 : vector<1x256xf32>, i32 -> vector<1x256xf32>
      %32 = arith.mulf %30, %31 : vector<1x256xf32>
      %c6 = arith.constant 6 : index
      %c0_17 = arith.constant 0 : index
      %33 = vector.load %arg4[%c6, %c0_17] : memref<7x256xf32, #tpu.memory_space<vmem>>, vector<1x256xf32>
      %c253_i32 = arith.constant 253 : i32
      %34 = tpu.dynamic_rotate %15 by %c253_i32 dim 1 : vector<1x256xf32>, i32 -> vector<1x256xf32>
      %35 = arith.mulf %33, %34 : vector<1x256xf32>
      %c0_18 = arith.constant 0 : index
      %36 = memref.load %arg5[%c0_18] : memref<98xf32, #tpu.memory_space<smem>>
      %37 = vector.broadcast %36 : f32 to vector<1x256xf32>
      %38 = arith.mulf %37, %18 : vector<1x256xf32>
      %c1_19 = arith.constant 1 : index
      %39 = memref.load %arg5[%c1_19] : memref<98xf32, #tpu.memory_space<smem>>
      %40 = vector.broadcast %39 : f32 to vector<1x256xf32>
      %41 = arith.mulf %40, %21 : vector<1x256xf32>
      %c2_20 = arith.constant 2 : index
      %42 = memref.load %arg5[%c2_20] : memref<98xf32, #tpu.memory_space<smem>>
      %43 = vector.broadcast %42 : f32 to vector<1x256xf32>
      %44 = arith.mulf %43, %24 : vector<1x256xf32>
      %c3_21 = arith.constant 3 : index
      %45 = memref.load %arg5[%c3_21] : memref<98xf32, #tpu.memory_space<smem>>
      %46 = vector.broadcast %45 : f32 to vector<1x256xf32>
      %47 = arith.mulf %46, %26 : vector<1x256xf32>
      %c4_22 = arith.constant 4 : index
      %48 = memref.load %arg5[%c4_22] : memref<98xf32, #tpu.memory_space<smem>>
      %49 = vector.broadcast %48 : f32 to vector<1x256xf32>
      %50 = arith.mulf %49, %29 : vector<1x256xf32>
      %c5_23 = arith.constant 5 : index
      %51 = memref.load %arg5[%c5_23] : memref<98xf32, #tpu.memory_space<smem>>
      %52 = vector.broadcast %51 : f32 to vector<1x256xf32>
      %53 = arith.mulf %52, %32 : vector<1x256xf32>
      %c6_24 = arith.constant 6 : index
      %54 = memref.load %arg5[%c6_24] : memref<98xf32, #tpu.memory_space<smem>>
      %55 = vector.broadcast %54 : f32 to vector<1x256xf32>
      %56 = arith.mulf %55, %35 : vector<1x256xf32>
      %57 = arith.addf %38, %41 : vector<1x256xf32>
      %58 = arith.addf %44, %47 : vector<1x256xf32>
      %59 = arith.addf %50, %53 : vector<1x256xf32>
      %60 = arith.addf %57, %58 : vector<1x256xf32>
      %61 = arith.addf %59, %56 : vector<1x256xf32>
      %62 = arith.addf %60, %61 : vector<1x256xf32>
      %c0_25 = arith.constant 0 : index
      %c0_26 = arith.constant 0 : index
      %63 = vector.load %arg3[%c0_25, %c0_26] : memref<7x256xf32, #tpu.memory_space<vmem>>, vector<1x256xf32>
      %c48_i32 = arith.constant 48 : i32
      %64 = tpu.dynamic_rotate %62 by %c48_i32 dim 1 : vector<1x256xf32>, i32 -> vector<1x256xf32>
      %65 = arith.mulf %63, %64 : vector<1x256xf32>
      %c7 = arith.constant 7 : index
      %66 = memref.load %arg5[%c7] : memref<98xf32, #tpu.memory_space<smem>>
      %67 = vector.broadcast %66 : f32 to vector<1x256xf32>
      %68 = arith.mulf %67, %18 : vector<1x256xf32>
      %c8 = arith.constant 8 : index
      %69 = memref.load %arg5[%c8] : memref<98xf32, #tpu.memory_space<smem>>
      %70 = vector.broadcast %69 : f32 to vector<1x256xf32>
      %71 = arith.mulf %70, %21 : vector<1x256xf32>
      %c9 = arith.constant 9 : index
      %72 = memref.load %arg5[%c9] : memref<98xf32, #tpu.memory_space<smem>>
      %73 = vector.broadcast %72 : f32 to vector<1x256xf32>
      %74 = arith.mulf %73, %24 : vector<1x256xf32>
      %c10 = arith.constant 10 : index
      %75 = memref.load %arg5[%c10] : memref<98xf32, #tpu.memory_space<smem>>
      %76 = vector.broadcast %75 : f32 to vector<1x256xf32>
      %77 = arith.mulf %76, %26 : vector<1x256xf32>
      %c11 = arith.constant 11 : index
      %78 = memref.load %arg5[%c11] : memref<98xf32, #tpu.memory_space<smem>>
      %79 = vector.broadcast %78 : f32 to vector<1x256xf32>
      %80 = arith.mulf %79, %29 : vector<1x256xf32>
      %c12 = arith.constant 12 : index
      %81 = memref.load %arg5[%c12] : memref<98xf32, #tpu.memory_space<smem>>
      %82 = vector.broadcast %81 : f32 to vector<1x256xf32>
      %83 = arith.mulf %82, %32 : vector<1x256xf32>
      %c13 = arith.constant 13 : index
      %84 = memref.load %arg5[%c13] : memref<98xf32, #tpu.memory_space<smem>>
      %85 = vector.broadcast %84 : f32 to vector<1x256xf32>
      %86 = arith.mulf %85, %35 : vector<1x256xf32>
      %87 = arith.addf %68, %71 : vector<1x256xf32>
      %88 = arith.addf %74, %77 : vector<1x256xf32>
      %89 = arith.addf %80, %83 : vector<1x256xf32>
      %90 = arith.addf %87, %88 : vector<1x256xf32>
      %91 = arith.addf %89, %86 : vector<1x256xf32>
      %92 = arith.addf %90, %91 : vector<1x256xf32>
      %c1_27 = arith.constant 1 : index
      %c0_28 = arith.constant 0 : index
      %93 = vector.load %arg3[%c1_27, %c0_28] : memref<7x256xf32, #tpu.memory_space<vmem>>, vector<1x256xf32>
      %c32_i32 = arith.constant 32 : i32
      %94 = tpu.dynamic_rotate %92 by %c32_i32 dim 1 : vector<1x256xf32>, i32 -> vector<1x256xf32>
      %95 = arith.mulf %93, %94 : vector<1x256xf32>
      %c14 = arith.constant 14 : index
      %96 = memref.load %arg5[%c14] : memref<98xf32, #tpu.memory_space<smem>>
      %97 = vector.broadcast %96 : f32 to vector<1x256xf32>
      %98 = arith.mulf %97, %18 : vector<1x256xf32>
      %c15 = arith.constant 15 : index
      %99 = memref.load %arg5[%c15] : memref<98xf32, #tpu.memory_space<smem>>
      %100 = vector.broadcast %99 : f32 to vector<1x256xf32>
      %101 = arith.mulf %100, %21 : vector<1x256xf32>
      %c16 = arith.constant 16 : index
      %102 = memref.load %arg5[%c16] : memref<98xf32, #tpu.memory_space<smem>>
      %103 = vector.broadcast %102 : f32 to vector<1x256xf32>
      %104 = arith.mulf %103, %24 : vector<1x256xf32>
      %c17 = arith.constant 17 : index
      %105 = memref.load %arg5[%c17] : memref<98xf32, #tpu.memory_space<smem>>
      %106 = vector.broadcast %105 : f32 to vector<1x256xf32>
      %107 = arith.mulf %106, %26 : vector<1x256xf32>
      %c18 = arith.constant 18 : index
      %108 = memref.load %arg5[%c18] : memref<98xf32, #tpu.memory_space<smem>>
      %109 = vector.broadcast %108 : f32 to vector<1x256xf32>
      %110 = arith.mulf %109, %29 : vector<1x256xf32>
      %c19 = arith.constant 19 : index
      %111 = memref.load %arg5[%c19] : memref<98xf32, #tpu.memory_space<smem>>
      %112 = vector.broadcast %111 : f32 to vector<1x256xf32>
      %113 = arith.mulf %112, %32 : vector<1x256xf32>
      %c20 = arith.constant 20 : index
      %114 = memref.load %arg5[%c20] : memref<98xf32, #tpu.memory_space<smem>>
      %115 = vector.broadcast %114 : f32 to vector<1x256xf32>
      %116 = arith.mulf %115, %35 : vector<1x256xf32>
      %117 = arith.addf %98, %101 : vector<1x256xf32>
      %118 = arith.addf %104, %107 : vector<1x256xf32>
      %119 = arith.addf %110, %113 : vector<1x256xf32>
      %120 = arith.addf %117, %118 : vector<1x256xf32>
      %121 = arith.addf %119, %116 : vector<1x256xf32>
      %122 = arith.addf %120, %121 : vector<1x256xf32>
      %c2_29 = arith.constant 2 : index
      %c0_30 = arith.constant 0 : index
      %123 = vector.load %arg3[%c2_29, %c0_30] : memref<7x256xf32, #tpu.memory_space<vmem>>, vector<1x256xf32>
      %c16_i32 = arith.constant 16 : i32
      %124 = tpu.dynamic_rotate %122 by %c16_i32 dim 1 : vector<1x256xf32>, i32 -> vector<1x256xf32>
      %125 = arith.mulf %123, %124 : vector<1x256xf32>
      %c21 = arith.constant 21 : index
      %126 = memref.load %arg5[%c21] : memref<98xf32, #tpu.memory_space<smem>>
      %127 = vector.broadcast %126 : f32 to vector<1x256xf32>
      %128 = arith.mulf %127, %18 : vector<1x256xf32>
      %c22 = arith.constant 22 : index
      %129 = memref.load %arg5[%c22] : memref<98xf32, #tpu.memory_space<smem>>
      %130 = vector.broadcast %129 : f32 to vector<1x256xf32>
      %131 = arith.mulf %130, %21 : vector<1x256xf32>
      %c23 = arith.constant 23 : index
      %132 = memref.load %arg5[%c23] : memref<98xf32, #tpu.memory_space<smem>>
      %133 = vector.broadcast %132 : f32 to vector<1x256xf32>
      %134 = arith.mulf %133, %24 : vector<1x256xf32>
      %c24 = arith.constant 24 : index
      %135 = memref.load %arg5[%c24] : memref<98xf32, #tpu.memory_space<smem>>
      %136 = vector.broadcast %135 : f32 to vector<1x256xf32>
      %137 = arith.mulf %136, %26 : vector<1x256xf32>
      %c25 = arith.constant 25 : index
      %138 = memref.load %arg5[%c25] : memref<98xf32, #tpu.memory_space<smem>>
      %139 = vector.broadcast %138 : f32 to vector<1x256xf32>
      %140 = arith.mulf %139, %29 : vector<1x256xf32>
      %c26 = arith.constant 26 : index
      %141 = memref.load %arg5[%c26] : memref<98xf32, #tpu.memory_space<smem>>
      %142 = vector.broadcast %141 : f32 to vector<1x256xf32>
      %143 = arith.mulf %142, %32 : vector<1x256xf32>
      %c27 = arith.constant 27 : index
      %144 = memref.load %arg5[%c27] : memref<98xf32, #tpu.memory_space<smem>>
      %145 = vector.broadcast %144 : f32 to vector<1x256xf32>
      %146 = arith.mulf %145, %35 : vector<1x256xf32>
      %147 = arith.addf %128, %131 : vector<1x256xf32>
      %148 = arith.addf %134, %137 : vector<1x256xf32>
      %149 = arith.addf %140, %143 : vector<1x256xf32>
      %150 = arith.addf %147, %148 : vector<1x256xf32>
      %151 = arith.addf %149, %146 : vector<1x256xf32>
      %152 = arith.addf %150, %151 : vector<1x256xf32>
      %c3_31 = arith.constant 3 : index
      %c0_32 = arith.constant 0 : index
      %153 = vector.load %arg3[%c3_31, %c0_32] : memref<7x256xf32, #tpu.memory_space<vmem>>, vector<1x256xf32>
      %154 = arith.mulf %153, %152 : vector<1x256xf32>
      %c28 = arith.constant 28 : index
      %155 = memref.load %arg5[%c28] : memref<98xf32, #tpu.memory_space<smem>>
      %156 = vector.broadcast %155 : f32 to vector<1x256xf32>
      %157 = arith.mulf %156, %18 : vector<1x256xf32>
      %c29 = arith.constant 29 : index
      %158 = memref.load %arg5[%c29] : memref<98xf32, #tpu.memory_space<smem>>
      %159 = vector.broadcast %158 : f32 to vector<1x256xf32>
      %160 = arith.mulf %159, %21 : vector<1x256xf32>
      %c30 = arith.constant 30 : index
      %161 = memref.load %arg5[%c30] : memref<98xf32, #tpu.memory_space<smem>>
      %162 = vector.broadcast %161 : f32 to vector<1x256xf32>
      %163 = arith.mulf %162, %24 : vector<1x256xf32>
      %c31 = arith.constant 31 : index
      %164 = memref.load %arg5[%c31] : memref<98xf32, #tpu.memory_space<smem>>
      %165 = vector.broadcast %164 : f32 to vector<1x256xf32>
      %166 = arith.mulf %165, %26 : vector<1x256xf32>
      %c32 = arith.constant 32 : index
      %167 = memref.load %arg5[%c32] : memref<98xf32, #tpu.memory_space<smem>>
      %168 = vector.broadcast %167 : f32 to vector<1x256xf32>
      %169 = arith.mulf %168, %29 : vector<1x256xf32>
      %c33 = arith.constant 33 : index
      %170 = memref.load %arg5[%c33] : memref<98xf32, #tpu.memory_space<smem>>
      %171 = vector.broadcast %170 : f32 to vector<1x256xf32>
      %172 = arith.mulf %171, %32 : vector<1x256xf32>
      %c34 = arith.constant 34 : index
      %173 = memref.load %arg5[%c34] : memref<98xf32, #tpu.memory_space<smem>>
      %174 = vector.broadcast %173 : f32 to vector<1x256xf32>
      %175 = arith.mulf %174, %35 : vector<1x256xf32>
      %176 = arith.addf %157, %160 : vector<1x256xf32>
      %177 = arith.addf %163, %166 : vector<1x256xf32>
      %178 = arith.addf %169, %172 : vector<1x256xf32>
      %179 = arith.addf %176, %177 : vector<1x256xf32>
      %180 = arith.addf %178, %175 : vector<1x256xf32>
      %181 = arith.addf %179, %180 : vector<1x256xf32>
      %c4_33 = arith.constant 4 : index
      %c0_34 = arith.constant 0 : index
      %182 = vector.load %arg3[%c4_33, %c0_34] : memref<7x256xf32, #tpu.memory_space<vmem>>, vector<1x256xf32>
      %c240_i32 = arith.constant 240 : i32
      %183 = tpu.dynamic_rotate %181 by %c240_i32 dim 1 : vector<1x256xf32>, i32 -> vector<1x256xf32>
      %184 = arith.mulf %182, %183 : vector<1x256xf32>
      %c35 = arith.constant 35 : index
      %185 = memref.load %arg5[%c35] : memref<98xf32, #tpu.memory_space<smem>>
      %186 = vector.broadcast %185 : f32 to vector<1x256xf32>
      %187 = arith.mulf %186, %18 : vector<1x256xf32>
      %c36 = arith.constant 36 : index
      %188 = memref.load %arg5[%c36] : memref<98xf32, #tpu.memory_space<smem>>
      %189 = vector.broadcast %188 : f32 to vector<1x256xf32>
      %190 = arith.mulf %189, %21 : vector<1x256xf32>
      %c37 = arith.constant 37 : index
      %191 = memref.load %arg5[%c37] : memref<98xf32, #tpu.memory_space<smem>>
      %192 = vector.broadcast %191 : f32 to vector<1x256xf32>
      %193 = arith.mulf %192, %24 : vector<1x256xf32>
      %c38 = arith.constant 38 : index
      %194 = memref.load %arg5[%c38] : memref<98xf32, #tpu.memory_space<smem>>
      %195 = vector.broadcast %194 : f32 to vector<1x256xf32>
      %196 = arith.mulf %195, %26 : vector<1x256xf32>
      %c39 = arith.constant 39 : index
      %197 = memref.load %arg5[%c39] : memref<98xf32, #tpu.memory_space<smem>>
      %198 = vector.broadcast %197 : f32 to vector<1x256xf32>
      %199 = arith.mulf %198, %29 : vector<1x256xf32>
      %c40 = arith.constant 40 : index
      %200 = memref.load %arg5[%c40] : memref<98xf32, #tpu.memory_space<smem>>
      %201 = vector.broadcast %200 : f32 to vector<1x256xf32>
      %202 = arith.mulf %201, %32 : vector<1x256xf32>
      %c41 = arith.constant 41 : index
      %203 = memref.load %arg5[%c41] : memref<98xf32, #tpu.memory_space<smem>>
      %204 = vector.broadcast %203 : f32 to vector<1x256xf32>
      %205 = arith.mulf %204, %35 : vector<1x256xf32>
      %206 = arith.addf %187, %190 : vector<1x256xf32>
      %207 = arith.addf %193, %196 : vector<1x256xf32>
      %208 = arith.addf %199, %202 : vector<1x256xf32>
      %209 = arith.addf %206, %207 : vector<1x256xf32>
      %210 = arith.addf %208, %205 : vector<1x256xf32>
      %211 = arith.addf %209, %210 : vector<1x256xf32>
      %c5_35 = arith.constant 5 : index
      %c0_36 = arith.constant 0 : index
      %212 = vector.load %arg3[%c5_35, %c0_36] : memref<7x256xf32, #tpu.memory_space<vmem>>, vector<1x256xf32>
      %c224_i32 = arith.constant 224 : i32
      %213 = tpu.dynamic_rotate %211 by %c224_i32 dim 1 : vector<1x256xf32>, i32 -> vector<1x256xf32>
      %214 = arith.mulf %212, %213 : vector<1x256xf32>
      %c42 = arith.constant 42 : index
      %215 = memref.load %arg5[%c42] : memref<98xf32, #tpu.memory_space<smem>>
      %216 = vector.broadcast %215 : f32 to vector<1x256xf32>
      %217 = arith.mulf %216, %18 : vector<1x256xf32>
      %c43 = arith.constant 43 : index
      %218 = memref.load %arg5[%c43] : memref<98xf32, #tpu.memory_space<smem>>
      %219 = vector.broadcast %218 : f32 to vector<1x256xf32>
      %220 = arith.mulf %219, %21 : vector<1x256xf32>
      %c44 = arith.constant 44 : index
      %221 = memref.load %arg5[%c44] : memref<98xf32, #tpu.memory_space<smem>>
      %222 = vector.broadcast %221 : f32 to vector<1x256xf32>
      %223 = arith.mulf %222, %24 : vector<1x256xf32>
      %c45 = arith.constant 45 : index
      %224 = memref.load %arg5[%c45] : memref<98xf32, #tpu.memory_space<smem>>
      %225 = vector.broadcast %224 : f32 to vector<1x256xf32>
      %226 = arith.mulf %225, %26 : vector<1x256xf32>
      %c46 = arith.constant 46 : index
      %227 = memref.load %arg5[%c46] : memref<98xf32, #tpu.memory_space<smem>>
      %228 = vector.broadcast %227 : f32 to vector<1x256xf32>
      %229 = arith.mulf %228, %29 : vector<1x256xf32>
      %c47 = arith.constant 47 : index
      %230 = memref.load %arg5[%c47] : memref<98xf32, #tpu.memory_space<smem>>
      %231 = vector.broadcast %230 : f32 to vector<1x256xf32>
      %232 = arith.mulf %231, %32 : vector<1x256xf32>
      %c48 = arith.constant 48 : index
      %233 = memref.load %arg5[%c48] : memref<98xf32, #tpu.memory_space<smem>>
      %234 = vector.broadcast %233 : f32 to vector<1x256xf32>
      %235 = arith.mulf %234, %35 : vector<1x256xf32>
      %236 = arith.addf %217, %220 : vector<1x256xf32>
      %237 = arith.addf %223, %226 : vector<1x256xf32>
      %238 = arith.addf %229, %232 : vector<1x256xf32>
      %239 = arith.addf %236, %237 : vector<1x256xf32>
      %240 = arith.addf %238, %235 : vector<1x256xf32>
      %241 = arith.addf %239, %240 : vector<1x256xf32>
      %c6_37 = arith.constant 6 : index
      %c0_38 = arith.constant 0 : index
      %242 = vector.load %arg3[%c6_37, %c0_38] : memref<7x256xf32, #tpu.memory_space<vmem>>, vector<1x256xf32>
      %c208_i32 = arith.constant 208 : i32
      %243 = tpu.dynamic_rotate %241 by %c208_i32 dim 1 : vector<1x256xf32>, i32 -> vector<1x256xf32>
      %244 = arith.mulf %242, %243 : vector<1x256xf32>
      %245 = arith.addf %65, %95 : vector<1x256xf32>
      %246 = arith.addf %125, %154 : vector<1x256xf32>
      %247 = arith.addf %184, %214 : vector<1x256xf32>
      %248 = arith.addf %245, %246 : vector<1x256xf32>
      %249 = arith.addf %247, %244 : vector<1x256xf32>
      %250 = arith.addf %248, %249 : vector<1x256xf32>
      %c0_39 = arith.constant 0 : index
      %c0_40 = arith.constant 0 : index
      %251 = vector.load %arg9[%c0_39, %c0_40] : memref<1x256xf32, #tpu.memory_space<vmem>>, vector<1x256xf32>
      %c0_41 = arith.constant 0 : index
      %c0_42 = arith.constant 0 : index
      %252 = vector.load %arg4[%c0_41, %c0_42] : memref<7x256xf32, #tpu.memory_space<vmem>>, vector<1x256xf32>
      %c3_i32_43 = arith.constant 3 : i32
      %253 = tpu.dynamic_rotate %251 by %c3_i32_43 dim 1 : vector<1x256xf32>, i32 -> vector<1x256xf32>
      %254 = arith.mulf %252, %253 : vector<1x256xf32>
      %c1_44 = arith.constant 1 : index
      %c0_45 = arith.constant 0 : index
      %255 = vector.load %arg4[%c1_44, %c0_45] : memref<7x256xf32, #tpu.memory_space<vmem>>, vector<1x256xf32>
      %c2_i32_46 = arith.constant 2 : i32
      %256 = tpu.dynamic_rotate %251 by %c2_i32_46 dim 1 : vector<1x256xf32>, i32 -> vector<1x256xf32>
      %257 = arith.mulf %255, %256 : vector<1x256xf32>
      %c2_47 = arith.constant 2 : index
      %c0_48 = arith.constant 0 : index
      %258 = vector.load %arg4[%c2_47, %c0_48] : memref<7x256xf32, #tpu.memory_space<vmem>>, vector<1x256xf32>
      %c1_i32_49 = arith.constant 1 : i32
      %259 = tpu.dynamic_rotate %251 by %c1_i32_49 dim 1 : vector<1x256xf32>, i32 -> vector<1x256xf32>
      %260 = arith.mulf %258, %259 : vector<1x256xf32>
      %c3_50 = arith.constant 3 : index
      %c0_51 = arith.constant 0 : index
      %261 = vector.load %arg4[%c3_50, %c0_51] : memref<7x256xf32, #tpu.memory_space<vmem>>, vector<1x256xf32>
      %262 = arith.mulf %261, %251 : vector<1x256xf32>
      %c4_52 = arith.constant 4 : index
      %c0_53 = arith.constant 0 : index
      %263 = vector.load %arg4[%c4_52, %c0_53] : memref<7x256xf32, #tpu.memory_space<vmem>>, vector<1x256xf32>
      %c255_i32_54 = arith.constant 255 : i32
      %264 = tpu.dynamic_rotate %251 by %c255_i32_54 dim 1 : vector<1x256xf32>, i32 -> vector<1x256xf32>
      %265 = arith.mulf %263, %264 : vector<1x256xf32>
      %c5_55 = arith.constant 5 : index
      %c0_56 = arith.constant 0 : index
      %266 = vector.load %arg4[%c5_55, %c0_56] : memref<7x256xf32, #tpu.memory_space<vmem>>, vector<1x256xf32>
      %c254_i32_57 = arith.constant 254 : i32
      %267 = tpu.dynamic_rotate %251 by %c254_i32_57 dim 1 : vector<1x256xf32>, i32 -> vector<1x256xf32>
      %268 = arith.mulf %266, %267 : vector<1x256xf32>
      %c6_58 = arith.constant 6 : index
      %c0_59 = arith.constant 0 : index
      %269 = vector.load %arg4[%c6_58, %c0_59] : memref<7x256xf32, #tpu.memory_space<vmem>>, vector<1x256xf32>
      %c253_i32_60 = arith.constant 253 : i32
      %270 = tpu.dynamic_rotate %251 by %c253_i32_60 dim 1 : vector<1x256xf32>, i32 -> vector<1x256xf32>
      %271 = arith.mulf %269, %270 : vector<1x256xf32>
      %c49 = arith.constant 49 : index
      %272 = memref.load %arg5[%c49] : memref<98xf32, #tpu.memory_space<smem>>
      %273 = vector.broadcast %272 : f32 to vector<1x256xf32>
      %274 = arith.mulf %273, %254 : vector<1x256xf32>
      %c50 = arith.constant 50 : index
      %275 = memref.load %arg5[%c50] : memref<98xf32, #tpu.memory_space<smem>>
      %276 = vector.broadcast %275 : f32 to vector<1x256xf32>
      %277 = arith.mulf %276, %257 : vector<1x256xf32>
      %c51 = arith.constant 51 : index
      %278 = memref.load %arg5[%c51] : memref<98xf32, #tpu.memory_space<smem>>
      %279 = vector.broadcast %278 : f32 to vector<1x256xf32>
      %280 = arith.mulf %279, %260 : vector<1x256xf32>
      %c52 = arith.constant 52 : index
      %281 = memref.load %arg5[%c52] : memref<98xf32, #tpu.memory_space<smem>>
      %282 = vector.broadcast %281 : f32 to vector<1x256xf32>
      %283 = arith.mulf %282, %262 : vector<1x256xf32>
      %c53 = arith.constant 53 : index
      %284 = memref.load %arg5[%c53] : memref<98xf32, #tpu.memory_space<smem>>
      %285 = vector.broadcast %284 : f32 to vector<1x256xf32>
      %286 = arith.mulf %285, %265 : vector<1x256xf32>
      %c54 = arith.constant 54 : index
      %287 = memref.load %arg5[%c54] : memref<98xf32, #tpu.memory_space<smem>>
      %288 = vector.broadcast %287 : f32 to vector<1x256xf32>
      %289 = arith.mulf %288, %268 : vector<1x256xf32>
      %c55 = arith.constant 55 : index
      %290 = memref.load %arg5[%c55] : memref<98xf32, #tpu.memory_space<smem>>
      %291 = vector.broadcast %290 : f32 to vector<1x256xf32>
      %292 = arith.mulf %291, %271 : vector<1x256xf32>
      %293 = arith.addf %274, %277 : vector<1x256xf32>
      %294 = arith.addf %280, %283 : vector<1x256xf32>
      %295 = arith.addf %286, %289 : vector<1x256xf32>
      %296 = arith.addf %293, %294 : vector<1x256xf32>
      %297 = arith.addf %295, %292 : vector<1x256xf32>
      %298 = arith.addf %296, %297 : vector<1x256xf32>
      %c0_61 = arith.constant 0 : index
      %c0_62 = arith.constant 0 : index
      %299 = vector.load %arg3[%c0_61, %c0_62] : memref<7x256xf32, #tpu.memory_space<vmem>>, vector<1x256xf32>
      %c48_i32_63 = arith.constant 48 : i32
      %300 = tpu.dynamic_rotate %298 by %c48_i32_63 dim 1 : vector<1x256xf32>, i32 -> vector<1x256xf32>
      %301 = arith.mulf %299, %300 : vector<1x256xf32>
      %c56 = arith.constant 56 : index
      %302 = memref.load %arg5[%c56] : memref<98xf32, #tpu.memory_space<smem>>
      %303 = vector.broadcast %302 : f32 to vector<1x256xf32>
      %304 = arith.mulf %303, %254 : vector<1x256xf32>
      %c57 = arith.constant 57 : index
      %305 = memref.load %arg5[%c57] : memref<98xf32, #tpu.memory_space<smem>>
      %306 = vector.broadcast %305 : f32 to vector<1x256xf32>
      %307 = arith.mulf %306, %257 : vector<1x256xf32>
      %c58 = arith.constant 58 : index
      %308 = memref.load %arg5[%c58] : memref<98xf32, #tpu.memory_space<smem>>
      %309 = vector.broadcast %308 : f32 to vector<1x256xf32>
      %310 = arith.mulf %309, %260 : vector<1x256xf32>
      %c59 = arith.constant 59 : index
      %311 = memref.load %arg5[%c59] : memref<98xf32, #tpu.memory_space<smem>>
      %312 = vector.broadcast %311 : f32 to vector<1x256xf32>
      %313 = arith.mulf %312, %262 : vector<1x256xf32>
      %c60 = arith.constant 60 : index
      %314 = memref.load %arg5[%c60] : memref<98xf32, #tpu.memory_space<smem>>
      %315 = vector.broadcast %314 : f32 to vector<1x256xf32>
      %316 = arith.mulf %315, %265 : vector<1x256xf32>
      %c61 = arith.constant 61 : index
      %317 = memref.load %arg5[%c61] : memref<98xf32, #tpu.memory_space<smem>>
      %318 = vector.broadcast %317 : f32 to vector<1x256xf32>
      %319 = arith.mulf %318, %268 : vector<1x256xf32>
      %c62 = arith.constant 62 : index
      %320 = memref.load %arg5[%c62] : memref<98xf32, #tpu.memory_space<smem>>
      %321 = vector.broadcast %320 : f32 to vector<1x256xf32>
      %322 = arith.mulf %321, %271 : vector<1x256xf32>
      %323 = arith.addf %304, %307 : vector<1x256xf32>
      %324 = arith.addf %310, %313 : vector<1x256xf32>
      %325 = arith.addf %316, %319 : vector<1x256xf32>
      %326 = arith.addf %323, %324 : vector<1x256xf32>
      %327 = arith.addf %325, %322 : vector<1x256xf32>
      %328 = arith.addf %326, %327 : vector<1x256xf32>
      %c1_64 = arith.constant 1 : index
      %c0_65 = arith.constant 0 : index
      %329 = vector.load %arg3[%c1_64, %c0_65] : memref<7x256xf32, #tpu.memory_space<vmem>>, vector<1x256xf32>
      %c32_i32_66 = arith.constant 32 : i32
      %330 = tpu.dynamic_rotate %328 by %c32_i32_66 dim 1 : vector<1x256xf32>, i32 -> vector<1x256xf32>
      %331 = arith.mulf %329, %330 : vector<1x256xf32>
      %c63 = arith.constant 63 : index
      %332 = memref.load %arg5[%c63] : memref<98xf32, #tpu.memory_space<smem>>
      %333 = vector.broadcast %332 : f32 to vector<1x256xf32>
      %334 = arith.mulf %333, %254 : vector<1x256xf32>
      %c64 = arith.constant 64 : index
      %335 = memref.load %arg5[%c64] : memref<98xf32, #tpu.memory_space<smem>>
      %336 = vector.broadcast %335 : f32 to vector<1x256xf32>
      %337 = arith.mulf %336, %257 : vector<1x256xf32>
      %c65 = arith.constant 65 : index
      %338 = memref.load %arg5[%c65] : memref<98xf32, #tpu.memory_space<smem>>
      %339 = vector.broadcast %338 : f32 to vector<1x256xf32>
      %340 = arith.mulf %339, %260 : vector<1x256xf32>
      %c66 = arith.constant 66 : index
      %341 = memref.load %arg5[%c66] : memref<98xf32, #tpu.memory_space<smem>>
      %342 = vector.broadcast %341 : f32 to vector<1x256xf32>
      %343 = arith.mulf %342, %262 : vector<1x256xf32>
      %c67 = arith.constant 67 : index
      %344 = memref.load %arg5[%c67] : memref<98xf32, #tpu.memory_space<smem>>
      %345 = vector.broadcast %344 : f32 to vector<1x256xf32>
      %346 = arith.mulf %345, %265 : vector<1x256xf32>
      %c68 = arith.constant 68 : index
      %347 = memref.load %arg5[%c68] : memref<98xf32, #tpu.memory_space<smem>>
      %348 = vector.broadcast %347 : f32 to vector<1x256xf32>
      %349 = arith.mulf %348, %268 : vector<1x256xf32>
      %c69 = arith.constant 69 : index
      %350 = memref.load %arg5[%c69] : memref<98xf32, #tpu.memory_space<smem>>
      %351 = vector.broadcast %350 : f32 to vector<1x256xf32>
      %352 = arith.mulf %351, %271 : vector<1x256xf32>
      %353 = arith.addf %334, %337 : vector<1x256xf32>
      %354 = arith.addf %340, %343 : vector<1x256xf32>
      %355 = arith.addf %346, %349 : vector<1x256xf32>
      %356 = arith.addf %353, %354 : vector<1x256xf32>
      %357 = arith.addf %355, %352 : vector<1x256xf32>
      %358 = arith.addf %356, %357 : vector<1x256xf32>
      %c2_67 = arith.constant 2 : index
      %c0_68 = arith.constant 0 : index
      %359 = vector.load %arg3[%c2_67, %c0_68] : memref<7x256xf32, #tpu.memory_space<vmem>>, vector<1x256xf32>
      %c16_i32_69 = arith.constant 16 : i32
      %360 = tpu.dynamic_rotate %358 by %c16_i32_69 dim 1 : vector<1x256xf32>, i32 -> vector<1x256xf32>
      %361 = arith.mulf %359, %360 : vector<1x256xf32>
      %c70 = arith.constant 70 : index
      %362 = memref.load %arg5[%c70] : memref<98xf32, #tpu.memory_space<smem>>
      %363 = vector.broadcast %362 : f32 to vector<1x256xf32>
      %364 = arith.mulf %363, %254 : vector<1x256xf32>
      %c71 = arith.constant 71 : index
      %365 = memref.load %arg5[%c71] : memref<98xf32, #tpu.memory_space<smem>>
      %366 = vector.broadcast %365 : f32 to vector<1x256xf32>
      %367 = arith.mulf %366, %257 : vector<1x256xf32>
      %c72 = arith.constant 72 : index
      %368 = memref.load %arg5[%c72] : memref<98xf32, #tpu.memory_space<smem>>
      %369 = vector.broadcast %368 : f32 to vector<1x256xf32>
      %370 = arith.mulf %369, %260 : vector<1x256xf32>
      %c73 = arith.constant 73 : index
      %371 = memref.load %arg5[%c73] : memref<98xf32, #tpu.memory_space<smem>>
      %372 = vector.broadcast %371 : f32 to vector<1x256xf32>
      %373 = arith.mulf %372, %262 : vector<1x256xf32>
      %c74 = arith.constant 74 : index
      %374 = memref.load %arg5[%c74] : memref<98xf32, #tpu.memory_space<smem>>
      %375 = vector.broadcast %374 : f32 to vector<1x256xf32>
      %376 = arith.mulf %375, %265 : vector<1x256xf32>
      %c75 = arith.constant 75 : index
      %377 = memref.load %arg5[%c75] : memref<98xf32, #tpu.memory_space<smem>>
      %378 = vector.broadcast %377 : f32 to vector<1x256xf32>
      %379 = arith.mulf %378, %268 : vector<1x256xf32>
      %c76 = arith.constant 76 : index
      %380 = memref.load %arg5[%c76] : memref<98xf32, #tpu.memory_space<smem>>
      %381 = vector.broadcast %380 : f32 to vector<1x256xf32>
      %382 = arith.mulf %381, %271 : vector<1x256xf32>
      %383 = arith.addf %364, %367 : vector<1x256xf32>
      %384 = arith.addf %370, %373 : vector<1x256xf32>
      %385 = arith.addf %376, %379 : vector<1x256xf32>
      %386 = arith.addf %383, %384 : vector<1x256xf32>
      %387 = arith.addf %385, %382 : vector<1x256xf32>
      %388 = arith.addf %386, %387 : vector<1x256xf32>
      %c3_70 = arith.constant 3 : index
      %c0_71 = arith.constant 0 : index
      %389 = vector.load %arg3[%c3_70, %c0_71] : memref<7x256xf32, #tpu.memory_space<vmem>>, vector<1x256xf32>
      %390 = arith.mulf %389, %388 : vector<1x256xf32>
      %c77 = arith.constant 77 : index
      %391 = memref.load %arg5[%c77] : memref<98xf32, #tpu.memory_space<smem>>
      %392 = vector.broadcast %391 : f32 to vector<1x256xf32>
      %393 = arith.mulf %392, %254 : vector<1x256xf32>
      %c78 = arith.constant 78 : index
      %394 = memref.load %arg5[%c78] : memref<98xf32, #tpu.memory_space<smem>>
      %395 = vector.broadcast %394 : f32 to vector<1x256xf32>
      %396 = arith.mulf %395, %257 : vector<1x256xf32>
      %c79 = arith.constant 79 : index
      %397 = memref.load %arg5[%c79] : memref<98xf32, #tpu.memory_space<smem>>
      %398 = vector.broadcast %397 : f32 to vector<1x256xf32>
      %399 = arith.mulf %398, %260 : vector<1x256xf32>
      %c80 = arith.constant 80 : index
      %400 = memref.load %arg5[%c80] : memref<98xf32, #tpu.memory_space<smem>>
      %401 = vector.broadcast %400 : f32 to vector<1x256xf32>
      %402 = arith.mulf %401, %262 : vector<1x256xf32>
      %c81 = arith.constant 81 : index
      %403 = memref.load %arg5[%c81] : memref<98xf32, #tpu.memory_space<smem>>
      %404 = vector.broadcast %403 : f32 to vector<1x256xf32>
      %405 = arith.mulf %404, %265 : vector<1x256xf32>
      %c82 = arith.constant 82 : index
      %406 = memref.load %arg5[%c82] : memref<98xf32, #tpu.memory_space<smem>>
      %407 = vector.broadcast %406 : f32 to vector<1x256xf32>
      %408 = arith.mulf %407, %268 : vector<1x256xf32>
      %c83 = arith.constant 83 : index
      %409 = memref.load %arg5[%c83] : memref<98xf32, #tpu.memory_space<smem>>
      %410 = vector.broadcast %409 : f32 to vector<1x256xf32>
      %411 = arith.mulf %410, %271 : vector<1x256xf32>
      %412 = arith.addf %393, %396 : vector<1x256xf32>
      %413 = arith.addf %399, %402 : vector<1x256xf32>
      %414 = arith.addf %405, %408 : vector<1x256xf32>
      %415 = arith.addf %412, %413 : vector<1x256xf32>
      %416 = arith.addf %414, %411 : vector<1x256xf32>
      %417 = arith.addf %415, %416 : vector<1x256xf32>
      %c4_72 = arith.constant 4 : index
      %c0_73 = arith.constant 0 : index
      %418 = vector.load %arg3[%c4_72, %c0_73] : memref<7x256xf32, #tpu.memory_space<vmem>>, vector<1x256xf32>
      %c240_i32_74 = arith.constant 240 : i32
      %419 = tpu.dynamic_rotate %417 by %c240_i32_74 dim 1 : vector<1x256xf32>, i32 -> vector<1x256xf32>
      %420 = arith.mulf %418, %419 : vector<1x256xf32>
      %c84 = arith.constant 84 : index
      %421 = memref.load %arg5[%c84] : memref<98xf32, #tpu.memory_space<smem>>
      %422 = vector.broadcast %421 : f32 to vector<1x256xf32>
      %423 = arith.mulf %422, %254 : vector<1x256xf32>
      %c85 = arith.constant 85 : index
      %424 = memref.load %arg5[%c85] : memref<98xf32, #tpu.memory_space<smem>>
      %425 = vector.broadcast %424 : f32 to vector<1x256xf32>
      %426 = arith.mulf %425, %257 : vector<1x256xf32>
      %c86 = arith.constant 86 : index
      %427 = memref.load %arg5[%c86] : memref<98xf32, #tpu.memory_space<smem>>
      %428 = vector.broadcast %427 : f32 to vector<1x256xf32>
      %429 = arith.mulf %428, %260 : vector<1x256xf32>
      %c87 = arith.constant 87 : index
      %430 = memref.load %arg5[%c87] : memref<98xf32, #tpu.memory_space<smem>>
      %431 = vector.broadcast %430 : f32 to vector<1x256xf32>
      %432 = arith.mulf %431, %262 : vector<1x256xf32>
      %c88 = arith.constant 88 : index
      %433 = memref.load %arg5[%c88] : memref<98xf32, #tpu.memory_space<smem>>
      %434 = vector.broadcast %433 : f32 to vector<1x256xf32>
      %435 = arith.mulf %434, %265 : vector<1x256xf32>
      %c89 = arith.constant 89 : index
      %436 = memref.load %arg5[%c89] : memref<98xf32, #tpu.memory_space<smem>>
      %437 = vector.broadcast %436 : f32 to vector<1x256xf32>
      %438 = arith.mulf %437, %268 : vector<1x256xf32>
      %c90 = arith.constant 90 : index
      %439 = memref.load %arg5[%c90] : memref<98xf32, #tpu.memory_space<smem>>
      %440 = vector.broadcast %439 : f32 to vector<1x256xf32>
      %441 = arith.mulf %440, %271 : vector<1x256xf32>
      %442 = arith.addf %423, %426 : vector<1x256xf32>
      %443 = arith.addf %429, %432 : vector<1x256xf32>
      %444 = arith.addf %435, %438 : vector<1x256xf32>
      %445 = arith.addf %442, %443 : vector<1x256xf32>
      %446 = arith.addf %444, %441 : vector<1x256xf32>
      %447 = arith.addf %445, %446 : vector<1x256xf32>
      %c5_75 = arith.constant 5 : index
      %c0_76 = arith.constant 0 : index
      %448 = vector.load %arg3[%c5_75, %c0_76] : memref<7x256xf32, #tpu.memory_space<vmem>>, vector<1x256xf32>
      %c224_i32_77 = arith.constant 224 : i32
      %449 = tpu.dynamic_rotate %447 by %c224_i32_77 dim 1 : vector<1x256xf32>, i32 -> vector<1x256xf32>
      %450 = arith.mulf %448, %449 : vector<1x256xf32>
      %c91 = arith.constant 91 : index
      %451 = memref.load %arg5[%c91] : memref<98xf32, #tpu.memory_space<smem>>
      %452 = vector.broadcast %451 : f32 to vector<1x256xf32>
      %453 = arith.mulf %452, %254 : vector<1x256xf32>
      %c92 = arith.constant 92 : index
      %454 = memref.load %arg5[%c92] : memref<98xf32, #tpu.memory_space<smem>>
      %455 = vector.broadcast %454 : f32 to vector<1x256xf32>
      %456 = arith.mulf %455, %257 : vector<1x256xf32>
      %c93 = arith.constant 93 : index
      %457 = memref.load %arg5[%c93] : memref<98xf32, #tpu.memory_space<smem>>
      %458 = vector.broadcast %457 : f32 to vector<1x256xf32>
      %459 = arith.mulf %458, %260 : vector<1x256xf32>
      %c94 = arith.constant 94 : index
      %460 = memref.load %arg5[%c94] : memref<98xf32, #tpu.memory_space<smem>>
      %461 = vector.broadcast %460 : f32 to vector<1x256xf32>
      %462 = arith.mulf %461, %262 : vector<1x256xf32>
      %c95 = arith.constant 95 : index
      %463 = memref.load %arg5[%c95] : memref<98xf32, #tpu.memory_space<smem>>
      %464 = vector.broadcast %463 : f32 to vector<1x256xf32>
      %465 = arith.mulf %464, %265 : vector<1x256xf32>
      %c96 = arith.constant 96 : index
      %466 = memref.load %arg5[%c96] : memref<98xf32, #tpu.memory_space<smem>>
      %467 = vector.broadcast %466 : f32 to vector<1x256xf32>
      %468 = arith.mulf %467, %268 : vector<1x256xf32>
      %c97 = arith.constant 97 : index
      %469 = memref.load %arg5[%c97] : memref<98xf32, #tpu.memory_space<smem>>
      %470 = vector.broadcast %469 : f32 to vector<1x256xf32>
      %471 = arith.mulf %470, %271 : vector<1x256xf32>
      %472 = arith.addf %453, %456 : vector<1x256xf32>
      %473 = arith.addf %459, %462 : vector<1x256xf32>
      %474 = arith.addf %465, %468 : vector<1x256xf32>
      %475 = arith.addf %472, %473 : vector<1x256xf32>
      %476 = arith.addf %474, %471 : vector<1x256xf32>
      %477 = arith.addf %475, %476 : vector<1x256xf32>
      %c6_78 = arith.constant 6 : index
      %c0_79 = arith.constant 0 : index
      %478 = vector.load %arg3[%c6_78, %c0_79] : memref<7x256xf32, #tpu.memory_space<vmem>>, vector<1x256xf32>
      %c208_i32_80 = arith.constant 208 : i32
      %479 = tpu.dynamic_rotate %477 by %c208_i32_80 dim 1 : vector<1x256xf32>, i32 -> vector<1x256xf32>
      %480 = arith.mulf %478, %479 : vector<1x256xf32>
      %481 = arith.addf %301, %331 : vector<1x256xf32>
      %482 = arith.addf %361, %390 : vector<1x256xf32>
      %483 = arith.addf %420, %450 : vector<1x256xf32>
      %484 = arith.addf %481, %482 : vector<1x256xf32>
      %485 = arith.addf %483, %480 : vector<1x256xf32>
      %486 = arith.addf %484, %485 : vector<1x256xf32>
      %487 = arith.addf %250, %486 : vector<1x256xf32>
      %c0_81 = arith.constant 0 : index
      %488 = memref.load %arg6[%c0_81] : memref<1xf32, #tpu.memory_space<smem>>
      %489 = vector.broadcast %488 : f32 to vector<1x256xf32>
      %490 = arith.addf %487, %489 : vector<1x256xf32>
      %491 = arith.negf %490 : vector<1x256xf32>
      %492 = math.exp %491 : vector<1x256xf32>
      %cst_82 = arith.constant 1.000000e+00 : f32
      %493 = vector.broadcast %cst_82 : f32 to vector<1x256xf32>
      %494 = arith.addf %493, %492 : vector<1x256xf32>
      %495 = arith.divf %493, %494 : vector<1x256xf32>
      %c0_83 = arith.constant 0 : index
      %c0_84 = arith.constant 0 : index
      %c0_85 = arith.constant 0 : index
      %496 = vector.load %arg7[%c0_83, %c0_84, %c0_85] : memref<1x1x256xf32, #tpu.memory_space<vmem>>, vector<1x1x256xf32>
      %497 = vector.shape_cast %496 : vector<1x1x256xf32> to vector<1x256xf32>
      %498 = vector.shape_cast %495 : vector<1x256xf32> to vector<1x1x256xf32>
      tpu.vector_store %arg7[%c0_83, %c0_84, %c0_85], %498 {strides = array<i32>} : memref<1x1x256xf32, #tpu.memory_space<vmem>>, vector<1x1x256xf32>,
    } else {
    }
    return
  }
  func.func @transform_0(%arg0: i32, %arg1: i32) -> (i32, i32, i32) {
    %c0_i32 = arith.constant 0 : i32
    %c0_i32_0 = arith.constant 0 : i32
    return %arg0, %arg1, %c0_i32 : i32, i32, i32
  }
  func.func @transform_1(%arg0: i32, %arg1: i32) -> (i32, i32) {
    %c0_i32 = arith.constant 0 : i32
    %c0_i32_0 = arith.constant 0 : i32
    %c0_i32_1 = arith.constant 0 : i32
    return %c0_i32, %c0_i32_0 : i32, i32
  }
  func.func @transform_2(%arg0: i32, %arg1: i32) -> (i32, i32) {
    %c0_i32 = arith.constant 0 : i32
    %c0_i32_0 = arith.constant 0 : i32
    %c0_i32_1 = arith.constant 0 : i32
    return %c0_i32, %c0_i32_0 : i32, i32
  }
  func.func @transform_3(%arg0: i32, %arg1: i32) -> i32 {
    %c0_i32 = arith.constant 0 : i32
    %c0_i32_0 = arith.constant 0 : i32
    return %c0_i32 : i32
  }
  func.func @transform_4(%arg0: i32, %arg1: i32) -> i32 {
    %c0_i32 = arith.constant 0 : i32
    %c0_i32_0 = arith.constant 0 : i32
    return %c0_i32 : i32
  }
  func.func @transform_5(%arg0: i32, %arg1: i32) -> (i32, i32, i32) {
    %c0_i32 = arith.constant 0 : i32
    %c0_i32_0 = arith.constant 0 : i32
    %c0_i32_1 = arith.constant 0 : i32
    return %arg0, %c0_i32, %c0_i32_0 : i32, i32, i32
  }
}

</mosaic_0001>

<llo_original>
// kernel: tpu_custom_call.1
$region0: #{tpu_custom_call.1}
  #allocation0 [shape = 'u32[]', space=smem, size = 0x4, offset = 0x4, fixed_abs, tag = 'smem constant byte address 0x4 - core index']
  #allocation1 [shape = 'u32[144,128]{1,0:T(1,128)}', space=vmem, size = 0x12000, scoped, tag = 'internal scratch']
  #allocation2 [shape = 'f32[1,256]{1,0:T(1,128)}', space=vmem, size = 0x400, scoped, tag = 'scratch operand']
  #allocation3 [shape = 'f32[1,256]{1,0:T(1,128)}', space=vmem, size = 0x400, scoped, tag = 'scratch operand']
  #allocation4 [shape = 'f32[1]{0:T(128)S(6)}', space=smem, size = 0x200, scoped, tag = 'scoped memory for tpu_custom_call.1']
  %s0 = inlined_call_operand.hbm [shape: f32[2,4,256], index: 0, kind: input, shape index: {}]
  %s1 = inlined_call_operand.hbm [shape: f32[7,256], index: 1, kind: input, shape index: {}]
  %s2 = inlined_call_operand.hbm [shape: f32[7,256], index: 2, kind: input, shape index: {}]
  %s3 = inlined_call_operand.vmem [shape: f32[98], index: 3, kind: input, shape index: {}]
  %s4 = inlined_call_operand.<no memory space> [shape: f32[1], index: 4, kind: input, shape index: {}]
  %s5 = inlined_call_operand.hbm [shape: f32[2,1,256], index: 5, kind: output, shape index: {}]
  %s6 = sld [smem:[#allocation0]]
  $region81: #{tpu_custom_call.1} parent=0
    _
  %s8 = ssub.s32 1, %s6
  %s9 = scalar_select 0, %s8, %s6
  %10 = sst [smem:[#allocation4]] %s4
  $region1: #{tpu_custom_call.1} parent=0
    #allocation5 [shape = 'u8[8192]{0}', space=vmem, size = 0x2000, scoped, tag = 'input window, operand 0']
    #allocation6 [shape = 's32[2]{0}', space=sflag, size = 0x8, scoped, tag = 'scoped memory for tpu_custom_call.1']
    #allocation7 [shape = 's32[2]{0}', space=sflag, size = 0x8, scoped, tag = 'scoped memory for tpu_custom_call.1']
    #allocation8 [shape = 's32[2]{0}', space=sflag, size = 0x8, scoped, tag = 'scoped memory for tpu_custom_call.1']
    #allocation9 [shape = 'u8[8192]{0}', space=vmem, size = 0x2000, scoped, tag = 'input window, operand 1, single buffered']
    #allocation10 [shape = 's32[1]{0}', space=sflag, size = 0x4, scoped, tag = 'scoped memory for tpu_custom_call.1']
    #allocation11 [shape = 'u8[8192]{0}', space=vmem, size = 0x2000, scoped, tag = 'input window, operand 2, single buffered']
    #allocation12 [shape = 'u8[512]{0}', space=smem, size = 0x200, scoped, tag = 'input window, operand 3, single buffered']
    #allocation13 [shape = 'u8[2048]{0}', space=vmem, size = 0x800, scoped, tag = 'output window, operand 0']
    %11 = vsyncpa [#allocation6], 0
    %s12 = scalar_lea.sflag [#allocation6], 1
    %13 = vsyncpa %s12, 0
    %14 = vsyncpa [#allocation10], 0
    %15 = vsyncpa [#allocation8], 0
    %16 = vsyncpa [#allocation7], 0
    %s17 = scalar_lea.sflag [#allocation7], 1
    %18 = vsyncpa %s17, 0
    loop: start=0, step=1, limit=4
    $region2: #{tpu_custom_call.1} parent=1 // loop_pre_header
      _
    $region3: #{tpu_custom_call.1} parent=1 // loop_header
      %s20 = sphi 0, %s24
      %p21 = scmp.ge.s32.totalorder %s20, 4
      %s27 = sphi 0, %s39
      %s28 = sphi 0, %s35
      %s29 = sphi 0, %s27
      %s30 = sphi 0, %s28
      %s31 = sphi 0, %s29
      %s32 = sphi 0, %s30
      %s44 = sphi 0, %s46
      %s47 = sphi 0, %s44
      %s48 = sphi 0, %s47
      %s64 = sphi 0, %s48
      %s68 = sphi 0, %s68
      %s70 = sphi 0, %s68
      %s71 = sphi 0, %s70
      %s85 = sphi 0, %s71
      %s89 = sphi 0, %s89
      %s91 = sphi 0, %s89
      %s92 = sphi 0, %s91
      %s106 = sphi 0, %s92
      %s110 = sphi 0, %s110
      %s112 = sphi 0, %s110
      %s113 = sphi 0, %s112
      %s127 = sphi 0, %s113
      %s131 = sphi 0, %s131
      %s133 = sphi 0, %s131
      %s134 = sphi 0, %s133
      %s148 = sphi 0, %s134
      %s154 = sphi 0, %s156
      %s157 = sphi 0, %s154
      %s158 = sphi 0, %s157
      %s174 = sphi 0, %s158
    $region4: #{tpu_custom_call.1} parent=1 // loop_header_branch
      %23 = sbr.rel (%p21) target = $region8
    $region5: #{tpu_custom_call.1} parent=1 // loop_body
      %s25 = ssub.s32 %s20, 1
      %s26 = ssub.s32 %s20, 2
      %s33 = sadd.s32 1, %s28
      %p34 = scmp.ge.s32.totalorder %s33, 1
      %s35 = scalar_select %p34, 0, %s33
      %s36 = sadd.s32 1, %s27
      %s37 = scalar_select %p34, %s36, %s27
      %p38 = scmp.ge.s32.totalorder %s37, 2
      %s39 = scalar_select %p38, 0, %s37
      %s40 = ssub.s32 %s27, %s39
      %s41 = ssub.s32 %s28, %s35
      %s42 = sor.u32 %s40, %s41
      %p43 = scmp.eq.s32.totalorder %s42, 0
      %s45 = sadd.s32 %s44, 1
      %s46 = scalar_select %p43, %s44, %s45
      %p49 = pneg %p43
      %p50 = scmp.eq.s32.totalorder %s20, 1
      %p51 = por %p49, %p50
      %p52 = scmp.ne.s32.totalorder %s44, %s47
      %p53 = scmp.eq.s32.totalorder %s20, 0
      %p54 = por %p52, %p53
      %p55 = scmp.ne.s32.totalorder %s44, %s47
      %p56 = scmp.eq.s32.totalorder %s25, 1
      %p57 = por %p55, %p56
      %p58 = scmp.ne.s32.totalorder %s47, %s48
      %p59 = scmp.eq.s32.totalorder %s25, 0
      %p60 = por %p58, %p59
      %p61 = scmp.ne.s32.totalorder %s47, %s48
      %p62 = scmp.eq.s32.totalorder %s26, 1
      %p63 = por %p61, %p62
      %p65 = scmp.ne.s32.totalorder %s48, %s64
      %p66 = scmp.eq.s32.totalorder %s26, 0
      %p67 = por %p65, %p66
      %s69 = sadd.s32 %s68, 1
      %p72 = scmp.eq.s32.totalorder %s20, 1
      %p73 = scmp.ne.s32.totalorder %s68, %s70
      %p74 = scmp.eq.s32.totalorder %s20, 0
      %p75 = por %p73, %p74
      %p76 = scmp.ne.s32.totalorder %s68, %s70
      %p77 = scmp.eq.s32.totalorder %s25, 1
      %p78 = por %p76, %p77
      %p79 = scmp.ne.s32.totalorder %s70, %s71
      %p80 = scmp.eq.s32.totalorder %s25, 0
      %p81 = por %p79, %p80
      %p82 = scmp.ne.s32.totalorder %s70, %s71
      %p83 = scmp.eq.s32.totalorder %s26, 1
      %p84 = por %p82, %p83
      %p86 = scmp.ne.s32.totalorder %s71, %s85
      %p87 = scmp.eq.s32.totalorder %s26, 0
      %p88 = por %p86, %p87
      %s90 = sadd.s32 %s89, 1
      %p93 = scmp.eq.s32.totalorder %s20, 1
      %p94 = scmp.ne.s32.totalorder %s89, %s91
      %p95 = scmp.eq.s32.totalorder %s20, 0
      %p96 = por %p94, %p95
      %p97 = scmp.ne.s32.totalorder %s89, %s91
      %p98 = scmp.eq.s32.totalorder %s25, 1
      %p99 = por %p97, %p98
      %p100 = scmp.ne.s32.totalorder %s91, %s92
      %p101 = scmp.eq.s32.totalorder %s25, 0
      %p102 = por %p100, %p101
      %p103 = scmp.ne.s32.totalorder %s91, %s92
      %p104 = scmp.eq.s32.totalorder %s26, 1
      %p105 = por %p103, %p104
      %p107 = scmp.ne.s32.totalorder %s92, %s106
      %p108 = scmp.eq.s32.totalorder %s26, 0
      %p109 = por %p107, %p108
      %s111 = sadd.s32 %s110, 1
      %p114 = scmp.eq.s32.totalorder %s20, 1
      %p115 = scmp.ne.s32.totalorder %s110, %s112
      %p116 = scmp.eq.s32.totalorder %s20, 0
      %p117 = por %p115, %p116
      %p118 = scmp.ne.s32.totalorder %s110, %s112
      %p119 = scmp.eq.s32.totalorder %s25, 1
      %p120 = por %p118, %p119
      %p121 = scmp.ne.s32.totalorder %s112, %s113
      %p122 = scmp.eq.s32.totalorder %s25, 0
      %p123 = por %p121, %p122
      %p124 = scmp.ne.s32.totalorder %s112, %s113
      %p125 = scmp.eq.s32.totalorder %s26, 1
      %p126 = por %p124, %p125
      %p128 = scmp.ne.s32.totalorder %s113, %s127
      %p129 = scmp.eq.s32.totalorder %s26, 0
      %p130 = por %p128, %p129
      %s132 = sadd.s32 %s131, 1
      %p135 = scmp.eq.s32.totalorder %s20, 1
      %p136 = scmp.ne.s32.totalorder %s131, %s133
      %p137 = scmp.eq.s32.totalorder %s20, 0
      %p138 = por %p136, %p137
      %p139 = scmp.ne.s32.totalorder %s131, %s133
      %p140 = scmp.eq.s32.totalorder %s25, 1
      %p141 = por %p139, %p140
      %p142 = scmp.ne.s32.totalorder %s133, %s134
      %p143 = scmp.eq.s32.totalorder %s25, 0
      %p144 = por %p142, %p143
      %p145 = scmp.ne.s32.totalorder %s133, %s134
      %p146 = scmp.eq.s32.totalorder %s26, 1
      %p147 = por %p145, %p146
      %p149 = scmp.ne.s32.totalorder %s134, %s148
      %p150 = scmp.eq.s32.totalorder %s26, 0
      %p151 = por %p149, %p150
      %s152 = ssub.s32 %s27, %s39
      %p153 = scmp.eq.s32.totalorder %s152, 0
      %s155 = sadd.s32 %s154, 1
      %s156 = scalar_select %p153, %s154, %s155
      %p159 = pneg %p153
      %p160 = scmp.eq.s32.totalorder %s20, 1
      %p161 = por %p159, %p160
      %p162 = scmp.ne.s32.totalorder %s154, %s157
      %p163 = scmp.eq.s32.totalorder %s20, 0
      %p164 = por %p162, %p163
      %p165 = scmp.ne.s32.totalorder %s154, %s157
      %p166 = scmp.eq.s32.totalorder %s25, 1
      %p167 = por %p165, %p166
      %p168 = scmp.ne.s32.totalorder %s157, %s158
      %p169 = scmp.eq.s32.totalorder %s25, 0
      %p170 = por %p168, %p169
      %p171 = scmp.ne.s32.totalorder %s157, %s158
      %p172 = scmp.eq.s32.totalorder %s26, 1
      %p173 = por %p171, %p172
      %p175 = scmp.ne.s32.totalorder %s158, %s174
      %p176 = scmp.eq.s32.totalorder %s26, 0
      %p177 = por %p175, %p176
      %p178 = scmp.le.s32.totalorder 1, %s20
      %p179 = scmp.lt.s32.totalorder %s20, 3
      %p180 = pnand %p178, %p179
      %p181 = pneg %p180
      // Predicated region
      $region9: #{tpu_custom_call.1} parent=5 // pred_check
        _
      $region10: #{tpu_custom_call.1} parent=5 // pred_check_branch
        %183 = sbr.rel (%p180) target = $region12
      $region11: #{tpu_custom_call.1} parent=5 // pred_region
        %s184 = ssub.s32 %s20, 1
        // Predicated region
        $region13: #{tpu_custom_call.1} parent=11 // pred_check
          %p185 = pneg %p81
        $region14: #{tpu_custom_call.1} parent=11 // pred_check_branch
          %187 = sbr.rel (%p185) target = $region16
        $region15: #{tpu_custom_call.1} parent=11 // pred_region
          %s189 = ssub.s32 256, 256
          %190 = vsyncadd [#allocation10], %s189
          %s192 = sshll.u32 [#allocation9], 4
          %s193 = int_to_ptr.vmem [resolvable:$true] %s192
          %195 = dma.hbm_to_vmem [thread:$0]  %s1, 256, %s193, [#allocation10]
        $region16: #{tpu_custom_call.1} parent=11 // pred_fallthru
          _
        // Predicated region
        $region17: #{tpu_custom_call.1} parent=11 // pred_check
          %p196 = pneg %p102
        $region18: #{tpu_custom_call.1} parent=11 // pred_check_branch
          %198 = sbr.rel (%p196) target = $region20
        $region19: #{tpu_custom_call.1} parent=11 // pred_region
          %s200 = ssub.s32 256, 256
          %201 = vsyncadd [#allocation10], %s200
          %s203 = sshll.u32 [#allocation11], 4
          %s204 = int_to_ptr.vmem [resolvable:$true] %s203
          %206 = dma.hbm_to_vmem [thread:$0]  %s2, 256, %s204, [#allocation10]
        $region20: #{tpu_custom_call.1} parent=11 // pred_fallthru
          _
        // Predicated region
        $region21: #{tpu_custom_call.1} parent=11 // pred_check
          %p207 = pneg %p123
        $region22: #{tpu_custom_call.1} parent=11 // pred_check_branch
          %209 = sbr.rel (%p207) target = $region24
        $region23: #{tpu_custom_call.1} parent=11 // pred_region
          %s211 = ssub.s32 16, 16
          %212 = vsyncadd [#allocation8], %s211
          %s214 = sshll.u32 %s3, 4
          %s215 = int_to_ptr.vmem [resolvable:$true] %s214
          %217 = dma.vmem_to_smem %s215, 16, [#allocation12], [#allocation8]
        $region24: #{tpu_custom_call.1} parent=11 // pred_fallthru
          _
        // Predicated region
        $region25: #{tpu_custom_call.1} parent=11 // pred_check
          %p218 = pneg %p144
        $region26: #{tpu_custom_call.1} parent=11 // pred_check_branch
          %220 = sbr.rel (%p218) target = $region28
        $region27: #{tpu_custom_call.1} parent=11 // pred_region
          _
        $region28: #{tpu_custom_call.1} parent=11 // pred_fallthru
          _
      $region12: #{tpu_custom_call.1} parent=5 // pred_fallthru
        _
      %p221 = scmp.lt.s32.totalorder %s20, 2
      // Predicated region
      $region29: #{tpu_custom_call.1} parent=5 // pred_check
        %p222 = pneg %p221
      $region30: #{tpu_custom_call.1} parent=5 // pred_check_branch
        %224 = sbr.rel (%p222) target = $region32
      $region31: #{tpu_custom_call.1} parent=5 // pred_region
        // Predicated region
        $region33: #{tpu_custom_call.1} parent=31 // pred_check
          %p225 = pneg %p54
        $region34: #{tpu_custom_call.1} parent=31 // pred_check_branch
          %227 = sbr.rel (%p225) target = $region36
        $region35: #{tpu_custom_call.1} parent=31 // pred_region
          %s228 = sand.u32 %s44, 1
          %s229 = scalar_lea.sflag [#allocation6], %s228
          %s230 = sand.u32 %s44, 1
          %s231 = smul.addr %s230, 8
          %s232 = scalar_lea.vmem [#allocation5], %s231
          %s234 = ssub.s32 128, 128
          %235 = vsyncadd %s229, %s234
          %s236 = smul.addr %s28, 2
          %s237 = smul.addr %s27, 2
          %s238 = sadd.s32 %s236, %s237
          %s239 = smul.addr %s238, 64
          %s240 = scalar_lea.hbm %s0, %s239
          %s242 = sshll.u32 %s232, 4
          %s243 = int_to_ptr.vmem [resolvable:$true] %s242
          %245 = dma.hbm_to_vmem [thread:$0]  %s240, 128, %s243, %s229
        $region36: #{tpu_custom_call.1} parent=31 // pred_fallthru
          _
      $region32: #{tpu_custom_call.1} parent=5 // pred_fallthru
        _
      %p246 = scmp.le.s32.totalorder 1, %s20
      %p247 = scmp.lt.s32.totalorder %s20, 3
      %p248 = pnand %p246, %p247
      %p249 = pneg %p248
      // Predicated region
      $region37: #{tpu_custom_call.1} parent=5 // pred_check
        _
      $region38: #{tpu_custom_call.1} parent=5 // pred_check_branch
        %251 = sbr.rel (%p248) target = $region40
      $region39: #{tpu_custom_call.1} parent=5 // pred_region
        %s252 = ssub.s32 %s20, 1
        %s253 = sand.u32 %s47, 1
        %s254 = scalar_lea.sflag [#allocation6], %s253
        %s255 = sand.u32 %s47, 1
        %s256 = smul.addr %s255, 8
        %s257 = scalar_lea.vmem [#allocation5], %s256
        // Predicated region
        $region41: #{tpu_custom_call.1} parent=39 // pred_check
          %p258 = pneg %p60
        $region42: #{tpu_custom_call.1} parent=39 // pred_check_branch
          %260 = sbr.rel (%p258) target = $region44
        $region43: #{tpu_custom_call.1} parent=39 // pred_region
          %261 = dma.done %s254, 128
        $region44: #{tpu_custom_call.1} parent=39 // pred_fallthru
          _
        // Predicated region
        $region45: #{tpu_custom_call.1} parent=39 // pred_check
          %p262 = pneg %p81
        $region46: #{tpu_custom_call.1} parent=39 // pred_check_branch
          %264 = sbr.rel (%p262) target = $region48
        $region47: #{tpu_custom_call.1} parent=39 // pred_region
          %265 = dma.done [#allocation10], 256
        $region48: #{tpu_custom_call.1} parent=39 // pred_fallthru
          _
        // Predicated region
        $region49: #{tpu_custom_call.1} parent=39 // pred_check
          %p266 = pneg %p102
        $region50: #{tpu_custom_call.1} parent=39 // pred_check_branch
          %268 = sbr.rel (%p266) target = $region52
        $region51: #{tpu_custom_call.1} parent=39 // pred_region
          %269 = dma.done [#allocation10], 256
        $region52: #{tpu_custom_call.1} parent=39 // pred_fallthru
          _
        // Predicated region
        $region53: #{tpu_custom_call.1} parent=39 // pred_check
          %p270 = pneg %p123
        $region54: #{tpu_custom_call.1} parent=39 // pred_check_branch
          %272 = sbr.rel (%p270) target = $region56
        $region55: #{tpu_custom_call.1} parent=39 // pred_region
          %273 = dma.done [#allocation8], 16
        $region56: #{tpu_custom_call.1} parent=39 // pred_fallthru
          _
        %274 = sfence
        %s275 = sand.u32 %s47, 1
        %s276 = scalar_lea.sflag [#allocation6], %s275
        %s277 = sand.u32 %s47, 1
        %s278 = smul.addr %s277, 8
        %s279 = scalar_lea.vmem [#allocation5], %s278
        %p280 = pneg %p60
        %p281 = pneg %p57
        %p282 = pneg %p81
        %p283 = pneg %p78
        %p284 = pneg %p102
        %p285 = pneg %p99
        %p286 = pneg %p123
        %p287 = pneg %p120
        %p288 = pneg %p144
        %p289 = pneg %p141
        %p290 = pneg %p170
        %p291 = pneg %p167
        %s292 = sand.u32 %s157, 1
        %s293 = scalar_lea.sflag [#allocation7], %s292
        %s294 = sand.u32 %s157, 1
        %s295 = smul.addr %s294, 2
        %s296 = scalar_lea.vmem [#allocation13], %s295
        %v297 = vld [vmem:[%s257] sm:$0xff]
        %v299 = vcombine.high %v297, %v297
        %vm301 = vcmask 1043456
        %v302 = vsel %vm301, %v297, 0.0
        %v303 = vrot.slane %v302, 4
        %v304 = vadd.f32 %v302, %v303
        %v305 = vrot.slane %v304, 2
        %v306 = vadd.f32 %v304, %v305
        %v307 = vrot.slane %v306, 1
        %v308 = vadd.f32 %v306, %v307
        %v309 = vsel %vm301, %v299, 0.0
        %v310 = vrot.slane %v309, 4
        %v311 = vadd.f32 %v309, %v310
        %v312 = vrot.slane %v311, 2
        %v313 = vadd.f32 %v311, %v312
        %v314 = vrot.slane %v313, 1
        %v315 = vadd.f32 %v313, %v314
        %v316 = vsel %vm301, %v297, -inf
        %v317 = vrot.slane %v316, 4
        %v318 = vmax.f32 %v316, %v317
        %v319 = vrot.slane %v318, 2
        %v320 = vmax.f32 %v318, %v319
        %v321 = vrot.slane %v320, 1
        %v322 = vmax.f32 %v320, %v321
        %v323 = vsel %vm301, %v299, -inf
        %v324 = vrot.slane %v323, 4
        %v325 = vmax.f32 %v323, %v324
        %v326 = vrot.slane %v325, 2
        %v327 = vmax.f32 %v325, %v326
        %v328 = vrot.slane %v327, 1
        %v329 = vmax.f32 %v327, %v328
        %p330 = scmp.eq.s32.totalorder %s30, 0
        // Predicated region
        $region57: #{tpu_custom_call.1} parent=39 // pred_check
          %p331 = pneg %p330
        $region58: #{tpu_custom_call.1} parent=39 // pred_check_branch
          %333 = sbr.rel (%p331) target = $region60
        $region59: #{tpu_custom_call.1} parent=39 // pred_region
          %v336 = vcombine.low %v308, %v315
          %v338 = vunpack.c.l.s4 1966171168
          %v339 = vunpack.c.0.s8 %v338
          %v340 = vlaneseq
          %v341 = vshrl.u32 %v340, 7
          %v342 = vsub.s32 %v339, %v341
          %v343 = vrot.slane %v336, %v342
          %v345 = vunpack.c.l.s4 1966171168
          %v346 = vunpack.c.0.s8 %v345
          %v347 = vlaneseq
          %v348 = vshrl.u32 %v347, 7
          %v349 = vsub.s32 %v346, %v348
          %v350 = vrot.slane %v343, %v349
          %v352 = vlaneseq
          %vm353 = vcmp.ge.s32.totalorder %v352, 0
          %vm354 = vcmp.lt.s32.totalorder %v352, 256
          %vm355 = vmand %vm353, %vm354
          %356 = vst.msk [vmem:[#allocation2] sm:$0x3] %vm355, %v350
          %v359 = vcombine.low %v322, %v329
          %v361 = vunpack.c.l.s4 1966171168
          %v362 = vunpack.c.0.s8 %v361
          %v363 = vlaneseq
          %v364 = vshrl.u32 %v363, 7
          %v365 = vsub.s32 %v362, %v364
          %v366 = vrot.slane %v359, %v365
          %v368 = vunpack.c.l.s4 1966171168
          %v369 = vunpack.c.0.s8 %v368
          %v370 = vlaneseq
          %v371 = vshrl.u32 %v370, 7
          %v372 = vsub.s32 %v369, %v371
          %v373 = vrot.slane %v366, %v372
          %375 = vst.msk [vmem:[#allocation3] sm:$0x3] %vm355, %v373
        $region60: #{tpu_custom_call.1} parent=39 // pred_fallthru
          _
        %p376 = scmp.ne.s32.totalorder %s30, 0
        // Predicated region
        $region61: #{tpu_custom_call.1} parent=39 // pred_check
          %p377 = pneg %p376
        $region62: #{tpu_custom_call.1} parent=39 // pred_check_branch
          %379 = sbr.rel (%p377) target = $region64
        $region63: #{tpu_custom_call.1} parent=39 // pred_region
          %v380 = vld [vmem:[#allocation2] sm:$0x3]
          %v383 = vcombine.low %v308, %v315
          %v385 = vunpack.c.l.s4 1966171168
          %v386 = vunpack.c.0.s8 %v385
          %v387 = vlaneseq
          %v388 = vshrl.u32 %v387, 7
          %v389 = vsub.s32 %v386, %v388
          %v390 = vrot.slane %v383, %v389
          %v392 = vunpack.c.l.s4 1966171168
          %v393 = vunpack.c.0.s8 %v392
          %v394 = vlaneseq
          %v395 = vshrl.u32 %v394, 7
          %v396 = vsub.s32 %v393, %v395
          %v397 = vrot.slane %v390, %v396
          %v399 = vadd.f32 %v380, %v397
          %v400 = vlaneseq
          %vm401 = vcmp.ge.s32.totalorder %v400, 0
          %vm402 = vcmp.lt.s32.totalorder %v400, 256
          %vm403 = vmand %vm401, %vm402
          %404 = vst.msk [vmem:[#allocation2] sm:$0x3] %vm403, %v399
          %v405 = vld [vmem:[#allocation3] sm:$0x3]
          %v408 = vcombine.low %v322, %v329
          %v410 = vunpack.c.l.s4 1966171168
          %v411 = vunpack.c.0.s8 %v410
          %v412 = vlaneseq
          %v413 = vshrl.u32 %v412, 7
          %v414 = vsub.s32 %v411, %v413
          %v415 = vrot.slane %v408, %v414
          %v417 = vunpack.c.l.s4 1966171168
          %v418 = vunpack.c.0.s8 %v417
          %v419 = vlaneseq
          %v420 = vshrl.u32 %v419, 7
          %v421 = vsub.s32 %v418, %v420
          %v422 = vrot.slane %v415, %v421
          %v424 = vmax.f32 %v405, %v422
          %425 = vst.msk [vmem:[#allocation3] sm:$0x3] %vm403, %v424
        $region64: #{tpu_custom_call.1} parent=39 // pred_fallthru
          _
        // Predicated region
        $region65: #{tpu_custom_call.1} parent=39 // pred_check
          %p426 = pneg %p330
        $region66: #{tpu_custom_call.1} parent=39 // pred_check_branch
          %428 = sbr.rel (%p426) target = $region68
        $region67: #{tpu_custom_call.1} parent=39 // pred_region
          %v429 = vld [vmem:[#allocation2] sm:$0x3]
          %v430 = vld [vmem:[#allocation11] ss:$8 sm:$0x3]
          %v432 = vlaneseq
          %v433 = vshrl.u32 %v432, 7
          %v434 = vsub.s32 0, %v433
          %v435 = vrot.slane %v429, %v434
          %v436 = vlaneseq
          %v437 = vshrl.u32 %v436, 7
          %v438 = vsub.s32 1, %v437
          %v439 = vrot.slane %v429, %v438
          %442 = vrot.lane.b32.xlu0 %v435, 3
          %v443 = vpop.permute.xlu0 %442
          %444 = vrot.lane.b32.xlu0 %v439, 3
          %v445 = vpop.permute.xlu0 %444
          %v446 = vlaneseq
          %v447 = vand.u32 %v446, 127
          %vm448 = vcmp.lt.s32.totalorder %v447, 3
          %v449 = vsel %vm448, %v443, %v445
          %v450 = vsel %vm448, %v445, %v443
          %v453 = vcombine.low %v450, %v449
          %v455 = vunpack.c.l.s4 1966171168
          %v456 = vunpack.c.0.s8 %v455
          %v457 = vlaneseq
          %v458 = vshrl.u32 %v457, 7
          %v459 = vsub.s32 %v456, %v458
          %v460 = vrot.slane %v453, %v459
          %v462 = vunpack.c.l.s4 1966171168
          %v463 = vunpack.c.0.s8 %v462
          %v464 = vlaneseq
          %v465 = vshrl.u32 %v464, 7
          %v466 = vsub.s32 %v463, %v465
          %v467 = vrot.slane %v460, %v466
          %v469 = vmul.f32 %v430, %v467
          %s470 = scalar_lea.vmem [#allocation11], 1
          %v471 = vld [vmem:[%s470] ss:$8 sm:$0x3]
          %472 = vrot.lane.b32.xlu0 %v435, 2
          %v473 = vpop.permute.xlu0 %472
          %474 = vrot.lane.b32.xlu0 %v439, 2
          %v475 = vpop.permute.xlu0 %474
          %vm476 = vcmp.lt.s32.totalorder %v447, 2
          %v477 = vsel %vm476, %v473, %v475
          %v478 = vsel %vm476, %v475, %v473
          %v481 = vcombine.low %v478, %v477
          %v483 = vunpack.c.l.s4 1966171168
          %v484 = vunpack.c.0.s8 %v483
          %v485 = vlaneseq
          %v486 = vshrl.u32 %v485, 7
          %v487 = vsub.s32 %v484, %v486
          %v488 = vrot.slane %v481, %v487
          %v490 = vunpack.c.l.s4 1966171168
          %v491 = vunpack.c.0.s8 %v490
          %v492 = vlaneseq
          %v493 = vshrl.u32 %v492, 7
          %v494 = vsub.s32 %v491, %v493
          %v495 = vrot.slane %v488, %v494
          %v497 = vmul.f32 %v471, %v495
          %s498 = scalar_lea.vmem [#allocation11], 2
          %v499 = vld [vmem:[%s498] ss:$8 sm:$0x3]
          %500 = vrot.lane.b32.xlu0 %v435, 1
          %v501 = vpop.permute.xlu0 %500
          %502 = vrot.lane.b32.xlu0 %v439, 1
          %v503 = vpop.permute.xlu0 %502
          %vm504 = vcmp.lt.s32.totalorder %v447, 1
          %v505 = vsel %vm504, %v501, %v503
          %v506 = vsel %vm504, %v503, %v501
          %v509 = vcombine.low %v506, %v505
          %v511 = vunpack.c.l.s4 1966171168
          %v512 = vunpack.c.0.s8 %v511
          %v513 = vlaneseq
          %v514 = vshrl.u32 %v513, 7
          %v515 = vsub.s32 %v512, %v514
          %v516 = vrot.slane %v509, %v515
          %v518 = vunpack.c.l.s4 1966171168
          %v519 = vunpack.c.0.s8 %v518
          %v520 = vlaneseq
          %v521 = vshrl.u32 %v520, 7
          %v522 = vsub.s32 %v519, %v521
          %v523 = vrot.slane %v516, %v522
          %v525 = vmul.f32 %v499, %v523
          %s526 = scalar_lea.vmem [#allocation11], 3
          %v527 = vld [vmem:[%s526] ss:$8 sm:$0x3]
          %v528 = vmul.f32 %v527, %v429
          %s529 = scalar_lea.vmem [#allocation11], 4
          %v530 = vld [vmem:[%s529] ss:$8 sm:$0x3]
          %531 = vrot.lane.b32.xlu0 %v435, 127
          %v532 = vpop.permute.xlu0 %531
          %533 = vrot.lane.b32.xlu0 %v439, 127
          %v534 = vpop.permute.xlu0 %533
          %vm535 = vcmp.lt.s32.totalorder %v447, 127
          %v536 = vsel %vm535, %v532, %v534
          %v537 = vsel %vm535, %v534, %v532
          %v540 = vcombine.low %v536, %v537
          %v542 = vunpack.c.l.s4 1966171168
          %v543 = vunpack.c.0.s8 %v542
          %v544 = vlaneseq
          %v545 = vshrl.u32 %v544, 7
          %v546 = vsub.s32 %v543, %v545
          %v547 = vrot.slane %v540, %v546
          %v549 = vunpack.c.l.s4 1966171168
          %v550 = vunpack.c.0.s8 %v549
          %v551 = vlaneseq
          %v552 = vshrl.u32 %v551, 7
          %v553 = vsub.s32 %v550, %v552
          %v554 = vrot.slane %v547, %v553
          %v556 = vmul.f32 %v530, %v554
          %s557 = scalar_lea.vmem [#allocation11], 5
          %v558 = vld [vmem:[%s557] ss:$8 sm:$0x3]
          %559 = vrot.lane.b32.xlu0 %v435, 126
          %v560 = vpop.permute.xlu0 %559
          %561 = vrot.lane.b32.xlu0 %v439, 126
          %v562 = vpop.permute.xlu0 %561
          %vm563 = vcmp.lt.s32.totalorder %v447, 126
          %v564 = vsel %vm563, %v560, %v562
          %v565 = vsel %vm563, %v562, %v560
          %v568 = vcombine.low %v564, %v565
          %v570 = vunpack.c.l.s4 1966171168
          %v571 = vunpack.c.0.s8 %v570
          %v572 = vlaneseq
          %v573 = vshrl.u32 %v572, 7
          %v574 = vsub.s32 %v571, %v573
          %v575 = vrot.slane %v568, %v574
          %v577 = vunpack.c.l.s4 1966171168
          %v578 = vunpack.c.0.s8 %v577
          %v579 = vlaneseq
          %v580 = vshrl.u32 %v579, 7
          %v581 = vsub.s32 %v578, %v580
          %v582 = vrot.slane %v575, %v581
          %v584 = vmul.f32 %v558, %v582
          %s585 = scalar_lea.vmem [#allocation11], 6
          %v586 = vld [vmem:[%s585] ss:$8 sm:$0x3]
          %587 = vrot.lane.b32.xlu0 %v435, 125
          %v588 = vpop.permute.xlu0 %587
          %589 = vrot.lane.b32.xlu0 %v439, 125
          %v590 = vpop.permute.xlu0 %589
          %vm591 = vcmp.lt.s32.totalorder %v447, 125
          %v592 = vsel %vm591, %v588, %v590
          %v593 = vsel %vm591, %v590, %v588
          %v596 = vcombine.low %v592, %v593
          %v598 = vunpack.c.l.s4 1966171168
          %v599 = vunpack.c.0.s8 %v598
          %v600 = vlaneseq
          %v601 = vshrl.u32 %v600, 7
          %v602 = vsub.s32 %v599, %v601
          %v603 = vrot.slane %v596, %v602
          %v605 = vunpack.c.l.s4 1966171168
          %v606 = vunpack.c.0.s8 %v605
          %v607 = vlaneseq
          %v608 = vshrl.u32 %v607, 7
          %v609 = vsub.s32 %v606, %v608
          %v610 = vrot.slane %v603, %v609
          %v612 = vmul.f32 %v586, %v610
          %s613 = sld [smem:[#allocation12]]
          %v614 = vstv %s613
          %v615 = vmul.f32 %v614, %v469
          %s616 = sld [smem:[#allocation12 + $0x1]]
          %v617 = vstv %s616
          %v618 = vmul.f32 %v617, %v497
          %s619 = sld [smem:[#allocation12 + $0x2]]
          %v620 = vstv %s619
          %v621 = vmul.f32 %v620, %v525
          %s622 = sld [smem:[#allocation12 + $0x3]]
          %v623 = vstv %s622
          %v624 = vmul.f32 %v623, %v528
          %s625 = sld [smem:[#allocation12 + $0x4]]
          %v626 = vstv %s625
          %v627 = vmul.f32 %v626, %v556
          %s628 = sld [smem:[#allocation12 + $0x5]]
          %v629 = vstv %s628
          %v630 = vmul.f32 %v629, %v584
          %s631 = sld [smem:[#allocation12 + $0x6]]
          %v632 = vstv %s631
          %v633 = vmul.f32 %v632, %v612
          %v634 = vadd.f32 %v615, %v618
          %v635 = vadd.f32 %v621, %v624
          %v636 = vadd.f32 %v627, %v630
          %v637 = vadd.f32 %v634, %v635
          %v638 = vadd.f32 %v636, %v633
          %v639 = vadd.f32 %v637, %v638
          %v640 = vld [vmem:[#allocation9] ss:$8 sm:$0x3]
          %v642 = vlaneseq
          %v643 = vshrl.u32 %v642, 7
          %v644 = vsub.s32 0, %v643
          %v645 = vrot.slane %v639, %v644
          %v646 = vlaneseq
          %v647 = vshrl.u32 %v646, 7
          %v648 = vsub.s32 1, %v647
          %v649 = vrot.slane %v639, %v648
          %652 = vrot.lane.b32.xlu0 %v645, 48
          %v653 = vpop.permute.xlu0 %652
          %654 = vrot.lane.b32.xlu0 %v649, 48
          %v655 = vpop.permute.xlu0 %654
          %vm656 = vcmp.lt.s32.totalorder %v447, 48
          %v657 = vsel %vm656, %v653, %v655
          %v658 = vsel %vm656, %v655, %v653
          %v661 = vcombine.low %v658, %v657
          %v663 = vunpack.c.l.s4 1966171168
          %v664 = vunpack.c.0.s8 %v663
          %v665 = vlaneseq
          %v666 = vshrl.u32 %v665, 7
          %v667 = vsub.s32 %v664, %v666
          %v668 = vrot.slane %v661, %v667
          %v670 = vunpack.c.l.s4 1966171168
          %v671 = vunpack.c.0.s8 %v670
          %v672 = vlaneseq
          %v673 = vshrl.u32 %v672, 7
          %v674 = vsub.s32 %v671, %v673
          %v675 = vrot.slane %v668, %v674
          %v677 = vmul.f32 %v640, %v675
          %s678 = sld [smem:[#allocation12 + $0x7]]
          %v679 = vstv %s678
          %v680 = vmul.f32 %v679, %v469
          %s681 = sld [smem:[#allocation12 + $0x8]]
          %v682 = vstv %s681
          %v683 = vmul.f32 %v682, %v497
          %s684 = sld [smem:[#allocation12 + $0x9]]
          %v685 = vstv %s684
          %v686 = vmul.f32 %v685, %v525
          %s687 = sld [smem:[#allocation12 + $0xa]]
          %v688 = vstv %s687
          %v689 = vmul.f32 %v688, %v528
          %s690 = sld [smem:[#allocation12 + $0xb]]
          %v691 = vstv %s690
          %v692 = vmul.f32 %v691, %v556
          %s693 = sld [smem:[#allocation12 + $0xc]]
          %v694 = vstv %s693
          %v695 = vmul.f32 %v694, %v584
          %s696 = sld [smem:[#allocation12 + $0xd]]
          %v697 = vstv %s696
          %v698 = vmul.f32 %v697, %v612
          %v699 = vadd.f32 %v680, %v683
          %v700 = vadd.f32 %v686, %v689
          %v701 = vadd.f32 %v692, %v695
          %v702 = vadd.f32 %v699, %v700
          %v703 = vadd.f32 %v701, %v698
          %v704 = vadd.f32 %v702, %v703
          %s705 = scalar_lea.vmem [#allocation9], 1
          %v706 = vld [vmem:[%s705] ss:$8 sm:$0x3]
          %v708 = vlaneseq
          %v709 = vshrl.u32 %v708, 7
          %v710 = vsub.s32 0, %v709
          %v711 = vrot.slane %v704, %v710
          %v712 = vlaneseq
          %v713 = vshrl.u32 %v712, 7
          %v714 = vsub.s32 1, %v713
          %v715 = vrot.slane %v704, %v714
          %718 = vrot.lane.b32.xlu0 %v711, 32
          %v719 = vpop.permute.xlu0 %718
          %720 = vrot.lane.b32.xlu0 %v715, 32
          %v721 = vpop.permute.xlu0 %720
          %vm722 = vcmp.lt.s32.totalorder %v447, 32
          %v723 = vsel %vm722, %v719, %v721
          %v724 = vsel %vm722, %v721, %v719
          %v727 = vcombine.low %v724, %v723
          %v729 = vunpack.c.l.s4 1966171168
          %v730 = vunpack.c.0.s8 %v729
          %v731 = vlaneseq
          %v732 = vshrl.u32 %v731, 7
          %v733 = vsub.s32 %v730, %v732
          %v734 = vrot.slane %v727, %v733
          %v736 = vunpack.c.l.s4 1966171168
          %v737 = vunpack.c.0.s8 %v736
          %v738 = vlaneseq
          %v739 = vshrl.u32 %v738, 7
          %v740 = vsub.s32 %v737, %v739
          %v741 = vrot.slane %v734, %v740
          %v743 = vmul.f32 %v706, %v741
          %s744 = sld [smem:[#allocation12 + $0xe]]
          %v745 = vstv %s744
          %v746 = vmul.f32 %v745, %v469
          %s747 = sld [smem:[#allocation12 + $0xf]]
          %v748 = vstv %s747
          %v749 = vmul.f32 %v748, %v497
          %s750 = sld [smem:[#allocation12 + $0x10]]
          %v751 = vstv %s750
          %v752 = vmul.f32 %v751, %v525
          %s753 = sld [smem:[#allocation12 + $0x11]]
          %v754 = vstv %s753
          %v755 = vmul.f32 %v754, %v528
          %s756 = sld [smem:[#allocation12 + $0x12]]
          %v757 = vstv %s756
          %v758 = vmul.f32 %v757, %v556
          %s759 = sld [smem:[#allocation12 + $0x13]]
          %v760 = vstv %s759
          %v761 = vmul.f32 %v760, %v584
          %s762 = sld [smem:[#allocation12 + $0x14]]
          %v763 = vstv %s762
          %v764 = vmul.f32 %v763, %v612
          %v765 = vadd.f32 %v746, %v749
          %v766 = vadd.f32 %v752, %v755
          %v767 = vadd.f32 %v758, %v761
          %v768 = vadd.f32 %v765, %v766
          %v769 = vadd.f32 %v767, %v764
          %v770 = vadd.f32 %v768, %v769
          %s771 = scalar_lea.vmem [#allocation9], 2
          %v772 = vld [vmem:[%s771] ss:$8 sm:$0x3]
          %v774 = vlaneseq
          %v775 = vshrl.u32 %v774, 7
          %v776 = vsub.s32 0, %v775
          %v777 = vrot.slane %v770, %v776
          %v778 = vlaneseq
          %v779 = vshrl.u32 %v778, 7
          %v780 = vsub.s32 1, %v779
          %v781 = vrot.slane %v770, %v780
          %784 = vrot.lane.b32.xlu0 %v777, 16
          %v785 = vpop.permute.xlu0 %784
          %786 = vrot.lane.b32.xlu0 %v781, 16
          %v787 = vpop.permute.xlu0 %786
          %vm788 = vcmp.lt.s32.totalorder %v447, 16
          %v789 = vsel %vm788, %v785, %v787
          %v790 = vsel %vm788, %v787, %v785
          %v793 = vcombine.low %v790, %v789
          %v795 = vunpack.c.l.s4 1966171168
          %v796 = vunpack.c.0.s8 %v795
          %v797 = vlaneseq
          %v798 = vshrl.u32 %v797, 7
          %v799 = vsub.s32 %v796, %v798
          %v800 = vrot.slane %v793, %v799
          %v802 = vunpack.c.l.s4 1966171168
          %v803 = vunpack.c.0.s8 %v802
          %v804 = vlaneseq
          %v805 = vshrl.u32 %v804, 7
          %v806 = vsub.s32 %v803, %v805
          %v807 = vrot.slane %v800, %v806
          %v809 = vmul.f32 %v772, %v807
          %s810 = sld [smem:[#allocation12 + $0x15]]
          %v811 = vstv %s810
          %v812 = vmul.f32 %v811, %v469
          %s813 = sld [smem:[#allocation12 + $0x16]]
          %v814 = vstv %s813
          %v815 = vmul.f32 %v814, %v497
          %s816 = sld [smem:[#allocation12 + $0x17]]
          %v817 = vstv %s816
          %v818 = vmul.f32 %v817, %v525
          %s819 = sld [smem:[#allocation12 + $0x18]]
          %v820 = vstv %s819
          %v821 = vmul.f32 %v820, %v528
          %s822 = sld [smem:[#allocation12 + $0x19]]
          %v823 = vstv %s822
          %v824 = vmul.f32 %v823, %v556
          %s825 = sld [smem:[#allocation12 + $0x1a]]
          %v826 = vstv %s825
          %v827 = vmul.f32 %v826, %v584
          %s828 = sld [smem:[#allocation12 + $0x1b]]
          %v829 = vstv %s828
          %v830 = vmul.f32 %v829, %v612
          %v831 = vadd.f32 %v812, %v815
          %v832 = vadd.f32 %v818, %v821
          %v833 = vadd.f32 %v824, %v827
          %v834 = vadd.f32 %v831, %v832
          %v835 = vadd.f32 %v833, %v830
          %v836 = vadd.f32 %v834, %v835
          %s837 = scalar_lea.vmem [#allocation9], 3
          %v838 = vld [vmem:[%s837] ss:$8 sm:$0x3]
          %v839 = vmul.f32 %v838, %v836
          %s840 = sld [smem:[#allocation12 + $0x1c]]
          %v841 = vstv %s840
          %v842 = vmul.f32 %v841, %v469
          %s843 = sld [smem:[#allocation12 + $0x1d]]
          %v844 = vstv %s843
          %v845 = vmul.f32 %v844, %v497
          %s846 = sld [smem:[#allocation12 + $0x1e]]
          %v847 = vstv %s846
          %v848 = vmul.f32 %v847, %v525
          %s849 = sld [smem:[#allocation12 + $0x1f]]
          %v850 = vstv %s849
          %v851 = vmul.f32 %v850, %v528
          %s852 = sld [smem:[#allocation12 + $0x20]]
          %v853 = vstv %s852
          %v854 = vmul.f32 %v853, %v556
          %s855 = sld [smem:[#allocation12 + $0x21]]
          %v856 = vstv %s855
          %v857 = vmul.f32 %v856, %v584
          %s858 = sld [smem:[#allocation12 + $0x22]]
          %v859 = vstv %s858
          %v860 = vmul.f32 %v859, %v612
          %v861 = vadd.f32 %v842, %v845
          %v862 = vadd.f32 %v848, %v851
          %v863 = vadd.f32 %v854, %v857
          %v864 = vadd.f32 %v861, %v862
          %v865 = vadd.f32 %v863, %v860
          %v866 = vadd.f32 %v864, %v865
          %s867 = scalar_lea.vmem [#allocation9], 4
          %v868 = vld [vmem:[%s867] ss:$8 sm:$0x3]
          %v870 = vlaneseq
          %v871 = vshrl.u32 %v870, 7
          %v872 = vsub.s32 0, %v871
          %v873 = vrot.slane %v866, %v872
          %v874 = vlaneseq
          %v875 = vshrl.u32 %v874, 7
          %v876 = vsub.s32 1, %v875
          %v877 = vrot.slane %v866, %v876
          %880 = vrot.lane.b32.xlu0 %v873, 112
          %v881 = vpop.permute.xlu0 %880
          %882 = vrot.lane.b32.xlu0 %v877, 112
          %v883 = vpop.permute.xlu0 %882
          %vm884 = vcmp.lt.s32.totalorder %v447, 112
          %v885 = vsel %vm884, %v881, %v883
          %v886 = vsel %vm884, %v883, %v881
          %v889 = vcombine.low %v885, %v886
          %v891 = vunpack.c.l.s4 1966171168
          %v892 = vunpack.c.0.s8 %v891
          %v893 = vlaneseq
          %v894 = vshrl.u32 %v893, 7
          %v895 = vsub.s32 %v892, %v894
          %v896 = vrot.slane %v889, %v895
          %v898 = vunpack.c.l.s4 1966171168
          %v899 = vunpack.c.0.s8 %v898
          %v900 = vlaneseq
          %v901 = vshrl.u32 %v900, 7
          %v902 = vsub.s32 %v899, %v901
          %v903 = vrot.slane %v896, %v902
          %v905 = vmul.f32 %v868, %v903
          %s906 = sld [smem:[#allocation12 + $0x23]]
          %v907 = vstv %s906
          %v908 = vmul.f32 %v907, %v469
          %s909 = sld [smem:[#allocation12 + $0x24]]
          %v910 = vstv %s909
          %v911 = vmul.f32 %v910, %v497
          %s912 = sld [smem:[#allocation12 + $0x25]]
          %v913 = vstv %s912
          %v914 = vmul.f32 %v913, %v525
          %s915 = sld [smem:[#allocation12 + $0x26]]
          %v916 = vstv %s915
          %v917 = vmul.f32 %v916, %v528
          %s918 = sld [smem:[#allocation12 + $0x27]]
          %v919 = vstv %s918
          %v920 = vmul.f32 %v919, %v556
          %s921 = sld [smem:[#allocation12 + $0x28]]
          %v922 = vstv %s921
          %v923 = vmul.f32 %v922, %v584
          %s924 = sld [smem:[#allocation12 + $0x29]]
          %v925 = vstv %s924
          %v926 = vmul.f32 %v925, %v612
          %v927 = vadd.f32 %v908, %v911
          %v928 = vadd.f32 %v914, %v917
          %v929 = vadd.f32 %v920, %v923
          %v930 = vadd.f32 %v927, %v928
          %v931 = vadd.f32 %v929, %v926
          %v932 = vadd.f32 %v930, %v931
          %s933 = scalar_lea.vmem [#allocation9], 5
          %v934 = vld [vmem:[%s933] ss:$8 sm:$0x3]
          %v936 = vlaneseq
          %v937 = vshrl.u32 %v936, 7
          %v938 = vsub.s32 0, %v937
          %v939 = vrot.slane %v932, %v938
          %v940 = vlaneseq
          %v941 = vshrl.u32 %v940, 7
          %v942 = vsub.s32 1, %v941
          %v943 = vrot.slane %v932, %v942
          %946 = vrot.lane.b32.xlu0 %v939, 96
          %v947 = vpop.permute.xlu0 %946
          %948 = vrot.lane.b32.xlu0 %v943, 96
          %v949 = vpop.permute.xlu0 %948
          %vm950 = vcmp.lt.s32.totalorder %v447, 96
          %v951 = vsel %vm950, %v947, %v949
          %v952 = vsel %vm950, %v949, %v947
          %v955 = vcombine.low %v951, %v952
          %v957 = vunpack.c.l.s4 1966171168
          %v958 = vunpack.c.0.s8 %v957
          %v959 = vlaneseq
          %v960 = vshrl.u32 %v959, 7
          %v961 = vsub.s32 %v958, %v960
          %v962 = vrot.slane %v955, %v961
          %v964 = vunpack.c.l.s4 1966171168
          %v965 = vunpack.c.0.s8 %v964
          %v966 = vlaneseq
          %v967 = vshrl.u32 %v966, 7
          %v968 = vsub.s32 %v965, %v967
          %v969 = vrot.slane %v962, %v968
          %v971 = vmul.f32 %v934, %v969
          %s972 = sld [smem:[#allocation12 + $0x2a]]
          %v973 = vstv %s972
          %v974 = vmul.f32 %v973, %v469
          %s975 = sld [smem:[#allocation12 + $0x2b]]
          %v976 = vstv %s975
          %v977 = vmul.f32 %v976, %v497
          %s978 = sld [smem:[#allocation12 + $0x2c]]
          %v979 = vstv %s978
          %v980 = vmul.f32 %v979, %v525
          %s981 = sld [smem:[#allocation12 + $0x2d]]
          %v982 = vstv %s981
          %v983 = vmul.f32 %v982, %v528
          %s984 = sld [smem:[#allocation12 + $0x2e]]
          %v985 = vstv %s984
          %v986 = vmul.f32 %v985, %v556
          %s987 = sld [smem:[#allocation12 + $0x2f]]
          %v988 = vstv %s987
          %v989 = vmul.f32 %v988, %v584
          %s990 = sld [smem:[#allocation12 + $0x30]]
          %v991 = vstv %s990
          %v992 = vmul.f32 %v991, %v612
          %v993 = vadd.f32 %v974, %v977
          %v994 = vadd.f32 %v980, %v983
          %v995 = vadd.f32 %v986, %v989
          %v996 = vadd.f32 %v993, %v994
          %v997 = vadd.f32 %v995, %v992
          %v998 = vadd.f32 %v996, %v997
          %s999 = scalar_lea.vmem [#allocation9], 6
          %v1000 = vld [vmem:[%s999] ss:$8 sm:$0x3]
          %v1002 = vlaneseq
          %v1003 = vshrl.u32 %v1002, 7
          %v1004 = vsub.s32 0, %v1003
          %v1005 = vrot.slane %v998, %v1004
          %v1006 = vlaneseq
          %v1007 = vshrl.u32 %v1006, 7
          %v1008 = vsub.s32 1, %v1007
          %v1009 = vrot.slane %v998, %v1008
          %1012 = vrot.lane.b32.xlu0 %v1005, 80
          %v1013 = vpop.permute.xlu0 %1012
          %1014 = vrot.lane.b32.xlu0 %v1009, 80
          %v1015 = vpop.permute.xlu0 %1014
          %vm1016 = vcmp.lt.s32.totalorder %v447, 80
          %v1017 = vsel %vm1016, %v1013, %v1015
          %v1018 = vsel %vm1016, %v1015, %v1013
          %v1021 = vcombine.low %v1017, %v1018
          %v1023 = vunpack.c.l.s4 1966171168
          %v1024 = vunpack.c.0.s8 %v1023
          %v1025 = vlaneseq
          %v1026 = vshrl.u32 %v1025, 7
          %v1027 = vsub.s32 %v1024, %v1026
          %v1028 = vrot.slane %v1021, %v1027
          %v1030 = vunpack.c.l.s4 1966171168
          %v1031 = vunpack.c.0.s8 %v1030
          %v1032 = vlaneseq
          %v1033 = vshrl.u32 %v1032, 7
          %v1034 = vsub.s32 %v1031, %v1033
          %v1035 = vrot.slane %v1028, %v1034
          %v1037 = vmul.f32 %v1000, %v1035
          %v1038 = vadd.f32 %v677, %v743
          %v1039 = vadd.f32 %v809, %v839
          %v1040 = vadd.f32 %v905, %v971
          %v1041 = vadd.f32 %v1038, %v1039
          %v1042 = vadd.f32 %v1040, %v1037
          %v1043 = vadd.f32 %v1041, %v1042
          %v1044 = vld [vmem:[#allocation3] sm:$0x3]
          %v1046 = vlaneseq
          %v1047 = vshrl.u32 %v1046, 7
          %v1048 = vsub.s32 0, %v1047
          %v1049 = vrot.slane %v1044, %v1048
          %v1050 = vlaneseq
          %v1051 = vshrl.u32 %v1050, 7
          %v1052 = vsub.s32 1, %v1051
          %v1053 = vrot.slane %v1044, %v1052
          %1056 = vrot.lane.b32.xlu0 %v1049, 3
          %v1057 = vpop.permute.xlu0 %1056
          %1058 = vrot.lane.b32.xlu0 %v1053, 3
          %v1059 = vpop.permute.xlu0 %1058
          %v1060 = vsel %vm448, %v1057, %v1059
          %v1061 = vsel %vm448, %v1059, %v1057
          %v1064 = vcombine.low %v1061, %v1060
          %v1066 = vunpack.c.l.s4 1966171168
          %v1067 = vunpack.c.0.s8 %v1066
          %v1068 = vlaneseq
          %v1069 = vshrl.u32 %v1068, 7
          %v1070 = vsub.s32 %v1067, %v1069
          %v1071 = vrot.slane %v1064, %v1070
          %v1073 = vunpack.c.l.s4 1966171168
          %v1074 = vunpack.c.0.s8 %v1073
          %v1075 = vlaneseq
          %v1076 = vshrl.u32 %v1075, 7
          %v1077 = vsub.s32 %v1074, %v1076
          %v1078 = vrot.slane %v1071, %v1077
          %v1080 = vmul.f32 %v430, %v1078
          %1081 = vrot.lane.b32.xlu0 %v1049, 2
          %v1082 = vpop.permute.xlu0 %1081
          %1083 = vrot.lane.b32.xlu0 %v1053, 2
          %v1084 = vpop.permute.xlu0 %1083
          %v1085 = vsel %vm476, %v1082, %v1084
          %v1086 = vsel %vm476, %v1084, %v1082
          %v1089 = vcombine.low %v1086, %v1085
          %v1091 = vunpack.c.l.s4 1966171168
          %v1092 = vunpack.c.0.s8 %v1091
          %v1093 = vlaneseq
          %v1094 = vshrl.u32 %v1093, 7
          %v1095 = vsub.s32 %v1092, %v1094
          %v1096 = vrot.slane %v1089, %v1095
          %v1098 = vunpack.c.l.s4 1966171168
          %v1099 = vunpack.c.0.s8 %v1098
          %v1100 = vlaneseq
          %v1101 = vshrl.u32 %v1100, 7
          %v1102 = vsub.s32 %v1099, %v1101
          %v1103 = vrot.slane %v1096, %v1102
          %v1105 = vmul.f32 %v471, %v1103
          %1106 = vrot.lane.b32.xlu0 %v1049, 1
          %v1107 = vpop.permute.xlu0 %1106
          %1108 = vrot.lane.b32.xlu0 %v1053, 1
          %v1109 = vpop.permute.xlu0 %1108
          %v1110 = vsel %vm504, %v1107, %v1109
          %v1111 = vsel %vm504, %v1109, %v1107
          %v1114 = vcombine.low %v1111, %v1110
          %v1116 = vunpack.c.l.s4 1966171168
          %v1117 = vunpack.c.0.s8 %v1116
          %v1118 = vlaneseq
          %v1119 = vshrl.u32 %v1118, 7
          %v1120 = vsub.s32 %v1117, %v1119
          %v1121 = vrot.slane %v1114, %v1120
          %v1123 = vunpack.c.l.s4 1966171168
          %v1124 = vunpack.c.0.s8 %v1123
          %v1125 = vlaneseq
          %v1126 = vshrl.u32 %v1125, 7
          %v1127 = vsub.s32 %v1124, %v1126
          %v1128 = vrot.slane %v1121, %v1127
          %v1130 = vmul.f32 %v499, %v1128
          %v1131 = vmul.f32 %v527, %v1044
          %1132 = vrot.lane.b32.xlu0 %v1049, 127
          %v1133 = vpop.permute.xlu0 %1132
          %1134 = vrot.lane.b32.xlu0 %v1053, 127
          %v1135 = vpop.permute.xlu0 %1134
          %v1136 = vsel %vm535, %v1133, %v1135
          %v1137 = vsel %vm535, %v1135, %v1133
          %v1140 = vcombine.low %v1136, %v1137
          %v1142 = vunpack.c.l.s4 1966171168
          %v1143 = vunpack.c.0.s8 %v1142
          %v1144 = vlaneseq
          %v1145 = vshrl.u32 %v1144, 7
          %v1146 = vsub.s32 %v1143, %v1145
          %v1147 = vrot.slane %v1140, %v1146
          %v1149 = vunpack.c.l.s4 1966171168
          %v1150 = vunpack.c.0.s8 %v1149
          %v1151 = vlaneseq
          %v1152 = vshrl.u32 %v1151, 7
          %v1153 = vsub.s32 %v1150, %v1152
          %v1154 = vrot.slane %v1147, %v1153
          %v1156 = vmul.f32 %v530, %v1154
          %1157 = vrot.lane.b32.xlu0 %v1049, 126
          %v1158 = vpop.permute.xlu0 %1157
          %1159 = vrot.lane.b32.xlu0 %v1053, 126
          %v1160 = vpop.permute.xlu0 %1159
          %v1161 = vsel %vm563, %v1158, %v1160
          %v1162 = vsel %vm563, %v1160, %v1158
          %v1165 = vcombine.low %v1161, %v1162
          %v1167 = vunpack.c.l.s4 1966171168
          %v1168 = vunpack.c.0.s8 %v1167
          %v1169 = vlaneseq
          %v1170 = vshrl.u32 %v1169, 7
          %v1171 = vsub.s32 %v1168, %v1170
          %v1172 = vrot.slane %v1165, %v1171
          %v1174 = vunpack.c.l.s4 1966171168
          %v1175 = vunpack.c.0.s8 %v1174
          %v1176 = vlaneseq
          %v1177 = vshrl.u32 %v1176, 7
          %v1178 = vsub.s32 %v1175, %v1177
          %v1179 = vrot.slane %v1172, %v1178
          %v1181 = vmul.f32 %v558, %v1179
          %1182 = vrot.lane.b32.xlu0 %v1049, 125
          %v1183 = vpop.permute.xlu0 %1182
          %1184 = vrot.lane.b32.xlu0 %v1053, 125
          %v1185 = vpop.permute.xlu0 %1184
          %v1186 = vsel %vm591, %v1183, %v1185
          %v1187 = vsel %vm591, %v1185, %v1183
          %v1190 = vcombine.low %v1186, %v1187
          %v1192 = vunpack.c.l.s4 1966171168
          %v1193 = vunpack.c.0.s8 %v1192
          %v1194 = vlaneseq
          %v1195 = vshrl.u32 %v1194, 7
          %v1196 = vsub.s32 %v1193, %v1195
          %v1197 = vrot.slane %v1190, %v1196
          %v1199 = vunpack.c.l.s4 1966171168
          %v1200 = vunpack.c.0.s8 %v1199
          %v1201 = vlaneseq
          %v1202 = vshrl.u32 %v1201, 7
          %v1203 = vsub.s32 %v1200, %v1202
          %v1204 = vrot.slane %v1197, %v1203
          %v1206 = vmul.f32 %v586, %v1204
          %s1207 = sld [smem:[#allocation12 + $0x31]]
          %v1208 = vstv %s1207
          %v1209 = vmul.f32 %v1208, %v1080
          %s1210 = sld [smem:[#allocation12 + $0x32]]
          %v1211 = vstv %s1210
          %v1212 = vmul.f32 %v1211, %v1105
          %s1213 = sld [smem:[#allocation12 + $0x33]]
          %v1214 = vstv %s1213
          %v1215 = vmul.f32 %v1214, %v1130
          %s1216 = sld [smem:[#allocation12 + $0x34]]
          %v1217 = vstv %s1216
          %v1218 = vmul.f32 %v1217, %v1131
          %s1219 = sld [smem:[#allocation12 + $0x35]]
          %v1220 = vstv %s1219
          %v1221 = vmul.f32 %v1220, %v1156
          %s1222 = sld [smem:[#allocation12 + $0x36]]
          %v1223 = vstv %s1222
          %v1224 = vmul.f32 %v1223, %v1181
          %s1225 = sld [smem:[#allocation12 + $0x37]]
          %v1226 = vstv %s1225
          %v1227 = vmul.f32 %v1226, %v1206
          %v1228 = vadd.f32 %v1209, %v1212
          %v1229 = vadd.f32 %v1215, %v1218
          %v1230 = vadd.f32 %v1221, %v1224
          %v1231 = vadd.f32 %v1228, %v1229
          %v1232 = vadd.f32 %v1230, %v1227
          %v1233 = vadd.f32 %v1231, %v1232
          %v1235 = vlaneseq
          %v1236 = vshrl.u32 %v1235, 7
          %v1237 = vsub.s32 0, %v1236
          %v1238 = vrot.slane %v1233, %v1237
          %v1239 = vlaneseq
          %v1240 = vshrl.u32 %v1239, 7
          %v1241 = vsub.s32 1, %v1240
          %v1242 = vrot.slane %v1233, %v1241
          %1245 = vrot.lane.b32.xlu0 %v1238, 48
          %v1246 = vpop.permute.xlu0 %1245
          %1247 = vrot.lane.b32.xlu0 %v1242, 48
          %v1248 = vpop.permute.xlu0 %1247
          %v1249 = vsel %vm656, %v1246, %v1248
          %v1250 = vsel %vm656, %v1248, %v1246
          %v1253 = vcombine.low %v1250, %v1249
          %v1255 = vunpack.c.l.s4 1966171168
          %v1256 = vunpack.c.0.s8 %v1255
          %v1257 = vlaneseq
          %v1258 = vshrl.u32 %v1257, 7
          %v1259 = vsub.s32 %v1256, %v1258
          %v1260 = vrot.slane %v1253, %v1259
          %v1262 = vunpack.c.l.s4 1966171168
          %v1263 = vunpack.c.0.s8 %v1262
          %v1264 = vlaneseq
          %v1265 = vshrl.u32 %v1264, 7
          %v1266 = vsub.s32 %v1263, %v1265
          %v1267 = vrot.slane %v1260, %v1266
          %v1269 = vmul.f32 %v640, %v1267
          %s1270 = sld [smem:[#allocation12 + $0x38]]
          %v1271 = vstv %s1270
          %v1272 = vmul.f32 %v1271, %v1080
          %s1273 = sld [smem:[#allocation12 + $0x39]]
          %v1274 = vstv %s1273
          %v1275 = vmul.f32 %v1274, %v1105
          %s1276 = sld [smem:[#allocation12 + $0x3a]]
          %v1277 = vstv %s1276
          %v1278 = vmul.f32 %v1277, %v1130
          %s1279 = sld [smem:[#allocation12 + $0x3b]]
          %v1280 = vstv %s1279
          %v1281 = vmul.f32 %v1280, %v1131
          %s1282 = sld [smem:[#allocation12 + $0x3c]]
          %v1283 = vstv %s1282
          %v1284 = vmul.f32 %v1283, %v1156
          %s1285 = sld [smem:[#allocation12 + $0x3d]]
          %v1286 = vstv %s1285
          %v1287 = vmul.f32 %v1286, %v1181
          %s1288 = sld [smem:[#allocation12 + $0x3e]]
          %v1289 = vstv %s1288
          %v1290 = vmul.f32 %v1289, %v1206
          %v1291 = vadd.f32 %v1272, %v1275
          %v1292 = vadd.f32 %v1278, %v1281
          %v1293 = vadd.f32 %v1284, %v1287
          %v1294 = vadd.f32 %v1291, %v1292
          %v1295 = vadd.f32 %v1293, %v1290
          %v1296 = vadd.f32 %v1294, %v1295
          %v1298 = vlaneseq
          %v1299 = vshrl.u32 %v1298, 7
          %v1300 = vsub.s32 0, %v1299
          %v1301 = vrot.slane %v1296, %v1300
          %v1302 = vlaneseq
          %v1303 = vshrl.u32 %v1302, 7
          %v1304 = vsub.s32 1, %v1303
          %v1305 = vrot.slane %v1296, %v1304
          %1308 = vrot.lane.b32.xlu0 %v1301, 32
          %v1309 = vpop.permute.xlu0 %1308
          %1310 = vrot.lane.b32.xlu0 %v1305, 32
          %v1311 = vpop.permute.xlu0 %1310
          %v1312 = vsel %vm722, %v1309, %v1311
          %v1313 = vsel %vm722, %v1311, %v1309
          %v1316 = vcombine.low %v1313, %v1312
          %v1318 = vunpack.c.l.s4 1966171168
          %v1319 = vunpack.c.0.s8 %v1318
          %v1320 = vlaneseq
          %v1321 = vshrl.u32 %v1320, 7
          %v1322 = vsub.s32 %v1319, %v1321
          %v1323 = vrot.slane %v1316, %v1322
          %v1325 = vunpack.c.l.s4 1966171168
          %v1326 = vunpack.c.0.s8 %v1325
          %v1327 = vlaneseq
          %v1328 = vshrl.u32 %v1327, 7
          %v1329 = vsub.s32 %v1326, %v1328
          %v1330 = vrot.slane %v1323, %v1329
          %v1332 = vmul.f32 %v706, %v1330
          %s1333 = sld [smem:[#allocation12 + $0x3f]]
          %v1334 = vstv %s1333
          %v1335 = vmul.f32 %v1334, %v1080
          %s1336 = sld [smem:[#allocation12 + $0x40]]
          %v1337 = vstv %s1336
          %v1338 = vmul.f32 %v1337, %v1105
          %s1339 = sld [smem:[#allocation12 + $0x41]]
          %v1340 = vstv %s1339
          %v1341 = vmul.f32 %v1340, %v1130
          %s1342 = sld [smem:[#allocation12 + $0x42]]
          %v1343 = vstv %s1342
          %v1344 = vmul.f32 %v1343, %v1131
          %s1345 = sld [smem:[#allocation12 + $0x43]]
          %v1346 = vstv %s1345
          %v1347 = vmul.f32 %v1346, %v1156
          %s1348 = sld [smem:[#allocation12 + $0x44]]
          %v1349 = vstv %s1348
          %v1350 = vmul.f32 %v1349, %v1181
          %s1351 = sld [smem:[#allocation12 + $0x45]]
          %v1352 = vstv %s1351
          %v1353 = vmul.f32 %v1352, %v1206
          %v1354 = vadd.f32 %v1335, %v1338
          %v1355 = vadd.f32 %v1341, %v1344
          %v1356 = vadd.f32 %v1347, %v1350
          %v1357 = vadd.f32 %v1354, %v1355
          %v1358 = vadd.f32 %v1356, %v1353
          %v1359 = vadd.f32 %v1357, %v1358
          %v1361 = vlaneseq
          %v1362 = vshrl.u32 %v1361, 7
          %v1363 = vsub.s32 0, %v1362
          %v1364 = vrot.slane %v1359, %v1363
          %v1365 = vlaneseq
          %v1366 = vshrl.u32 %v1365, 7
          %v1367 = vsub.s32 1, %v1366
          %v1368 = vrot.slane %v1359, %v1367
          %1371 = vrot.lane.b32.xlu0 %v1364, 16
          %v1372 = vpop.permute.xlu0 %1371
          %1373 = vrot.lane.b32.xlu0 %v1368, 16
          %v1374 = vpop.permute.xlu0 %1373
          %v1375 = vsel %vm788, %v1372, %v1374
          %v1376 = vsel %vm788, %v1374, %v1372
          %v1379 = vcombine.low %v1376, %v1375
          %v1381 = vunpack.c.l.s4 1966171168
          %v1382 = vunpack.c.0.s8 %v1381
          %v1383 = vlaneseq
          %v1384 = vshrl.u32 %v1383, 7
          %v1385 = vsub.s32 %v1382, %v1384
          %v1386 = vrot.slane %v1379, %v1385
          %v1388 = vunpack.c.l.s4 1966171168
          %v1389 = vunpack.c.0.s8 %v1388
          %v1390 = vlaneseq
          %v1391 = vshrl.u32 %v1390, 7
          %v1392 = vsub.s32 %v1389, %v1391
          %v1393 = vrot.slane %v1386, %v1392
          %v1395 = vmul.f32 %v772, %v1393
          %s1396 = sld [smem:[#allocation12 + $0x46]]
          %v1397 = vstv %s1396
          %v1398 = vmul.f32 %v1397, %v1080
          %s1399 = sld [smem:[#allocation12 + $0x47]]
          %v1400 = vstv %s1399
          %v1401 = vmul.f32 %v1400, %v1105
          %s1402 = sld [smem:[#allocation12 + $0x48]]
          %v1403 = vstv %s1402
          %v1404 = vmul.f32 %v1403, %v1130
          %s1405 = sld [smem:[#allocation12 + $0x49]]
          %v1406 = vstv %s1405
          %v1407 = vmul.f32 %v1406, %v1131
          %s1408 = sld [smem:[#allocation12 + $0x4a]]
          %v1409 = vstv %s1408
          %v1410 = vmul.f32 %v1409, %v1156
          %s1411 = sld [smem:[#allocation12 + $0x4b]]
          %v1412 = vstv %s1411
          %v1413 = vmul.f32 %v1412, %v1181
          %s1414 = sld [smem:[#allocation12 + $0x4c]]
          %v1415 = vstv %s1414
          %v1416 = vmul.f32 %v1415, %v1206
          %v1417 = vadd.f32 %v1398, %v1401
          %v1418 = vadd.f32 %v1404, %v1407
          %v1419 = vadd.f32 %v1410, %v1413
          %v1420 = vadd.f32 %v1417, %v1418
          %v1421 = vadd.f32 %v1419, %v1416
          %v1422 = vadd.f32 %v1420, %v1421
          %v1423 = vmul.f32 %v838, %v1422
          %s1424 = sld [smem:[#allocation12 + $0x4d]]
          %v1425 = vstv %s1424
          %v1426 = vmul.f32 %v1425, %v1080
          %s1427 = sld [smem:[#allocation12 + $0x4e]]
          %v1428 = vstv %s1427
          %v1429 = vmul.f32 %v1428, %v1105
          %s1430 = sld [smem:[#allocation12 + $0x4f]]
          %v1431 = vstv %s1430
          %v1432 = vmul.f32 %v1431, %v1130
          %s1433 = sld [smem:[#allocation12 + $0x50]]
          %v1434 = vstv %s1433
          %v1435 = vmul.f32 %v1434, %v1131
          %s1436 = sld [smem:[#allocation12 + $0x51]]
          %v1437 = vstv %s1436
          %v1438 = vmul.f32 %v1437, %v1156
          %s1439 = sld [smem:[#allocation12 + $0x52]]
          %v1440 = vstv %s1439
          %v1441 = vmul.f32 %v1440, %v1181
          %s1442 = sld [smem:[#allocation12 + $0x53]]
          %v1443 = vstv %s1442
          %v1444 = vmul.f32 %v1443, %v1206
          %v1445 = vadd.f32 %v1426, %v1429
          %v1446 = vadd.f32 %v1432, %v1435
          %v1447 = vadd.f32 %v1438, %v1441
          %v1448 = vadd.f32 %v1445, %v1446
          %v1449 = vadd.f32 %v1447, %v1444
          %v1450 = vadd.f32 %v1448, %v1449
          %v1452 = vlaneseq
          %v1453 = vshrl.u32 %v1452, 7
          %v1454 = vsub.s32 0, %v1453
          %v1455 = vrot.slane %v1450, %v1454
          %v1456 = vlaneseq
          %v1457 = vshrl.u32 %v1456, 7
          %v1458 = vsub.s32 1, %v1457
          %v1459 = vrot.slane %v1450, %v1458
          %1462 = vrot.lane.b32.xlu0 %v1455, 112
          %v1463 = vpop.permute.xlu0 %1462
          %1464 = vrot.lane.b32.xlu0 %v1459, 112
          %v1465 = vpop.permute.xlu0 %1464
          %v1466 = vsel %vm884, %v1463, %v1465
          %v1467 = vsel %vm884, %v1465, %v1463
          %v1470 = vcombine.low %v1466, %v1467
          %v1472 = vunpack.c.l.s4 1966171168
          %v1473 = vunpack.c.0.s8 %v1472
          %v1474 = vlaneseq
          %v1475 = vshrl.u32 %v1474, 7
          %v1476 = vsub.s32 %v1473, %v1475
          %v1477 = vrot.slane %v1470, %v1476
          %v1479 = vunpack.c.l.s4 1966171168
          %v1480 = vunpack.c.0.s8 %v1479
          %v1481 = vlaneseq
          %v1482 = vshrl.u32 %v1481, 7
          %v1483 = vsub.s32 %v1480, %v1482
          %v1484 = vrot.slane %v1477, %v1483
          %v1486 = vmul.f32 %v868, %v1484
          %s1487 = sld [smem:[#allocation12 + $0x54]]
          %v1488 = vstv %s1487
          %v1489 = vmul.f32 %v1488, %v1080
          %s1490 = sld [smem:[#allocation12 + $0x55]]
          %v1491 = vstv %s1490
          %v1492 = vmul.f32 %v1491, %v1105
          %s1493 = sld [smem:[#allocation12 + $0x56]]
          %v1494 = vstv %s1493
          %v1495 = vmul.f32 %v1494, %v1130
          %s1496 = sld [smem:[#allocation12 + $0x57]]
          %v1497 = vstv %s1496
          %v1498 = vmul.f32 %v1497, %v1131
          %s1499 = sld [smem:[#allocation12 + $0x58]]
          %v1500 = vstv %s1499
          %v1501 = vmul.f32 %v1500, %v1156
          %s1502 = sld [smem:[#allocation12 + $0x59]]
          %v1503 = vstv %s1502
          %v1504 = vmul.f32 %v1503, %v1181
          %s1505 = sld [smem:[#allocation12 + $0x5a]]
          %v1506 = vstv %s1505
          %v1507 = vmul.f32 %v1506, %v1206
          %v1508 = vadd.f32 %v1489, %v1492
          %v1509 = vadd.f32 %v1495, %v1498
          %v1510 = vadd.f32 %v1501, %v1504
          %v1511 = vadd.f32 %v1508, %v1509
          %v1512 = vadd.f32 %v1510, %v1507
          %v1513 = vadd.f32 %v1511, %v1512
          %v1515 = vlaneseq
          %v1516 = vshrl.u32 %v1515, 7
          %v1517 = vsub.s32 0, %v1516
          %v1518 = vrot.slane %v1513, %v1517
          %v1519 = vlaneseq
          %v1520 = vshrl.u32 %v1519, 7
          %v1521 = vsub.s32 1, %v1520
          %v1522 = vrot.slane %v1513, %v1521
          %1525 = vrot.lane.b32.xlu0 %v1518, 96
          %v1526 = vpop.permute.xlu0 %1525
          %1527 = vrot.lane.b32.xlu0 %v1522, 96
          %v1528 = vpop.permute.xlu0 %1527
          %v1529 = vsel %vm950, %v1526, %v1528
          %v1530 = vsel %vm950, %v1528, %v1526
          %v1533 = vcombine.low %v1529, %v1530
          %v1535 = vunpack.c.l.s4 1966171168
          %v1536 = vunpack.c.0.s8 %v1535
          %v1537 = vlaneseq
          %v1538 = vshrl.u32 %v1537, 7
          %v1539 = vsub.s32 %v1536, %v1538
          %v1540 = vrot.slane %v1533, %v1539
          %v1542 = vunpack.c.l.s4 1966171168
          %v1543 = vunpack.c.0.s8 %v1542
          %v1544 = vlaneseq
          %v1545 = vshrl.u32 %v1544, 7
          %v1546 = vsub.s32 %v1543, %v1545
          %v1547 = vrot.slane %v1540, %v1546
          %v1549 = vmul.f32 %v934, %v1547
          %s1550 = sld [smem:[#allocation12 + $0x5b]]
          %v1551 = vstv %s1550
          %v1552 = vmul.f32 %v1551, %v1080
          %s1553 = sld [smem:[#allocation12 + $0x5c]]
          %v1554 = vstv %s1553
          %v1555 = vmul.f32 %v1554, %v1105
          %s1556 = sld [smem:[#allocation12 + $0x5d]]
          %v1557 = vstv %s1556
          %v1558 = vmul.f32 %v1557, %v1130
          %s1559 = sld [smem:[#allocation12 + $0x5e]]
          %v1560 = vstv %s1559
          %v1561 = vmul.f32 %v1560, %v1131
          %s1562 = sld [smem:[#allocation12 + $0x5f]]
          %v1563 = vstv %s1562
          %v1564 = vmul.f32 %v1563, %v1156
          %s1565 = sld [smem:[#allocation12 + $0x60]]
          %v1566 = vstv %s1565
          %v1567 = vmul.f32 %v1566, %v1181
          %s1568 = sld [smem:[#allocation12 + $0x61]]
          %v1569 = vstv %s1568
          %v1570 = vmul.f32 %v1569, %v1206
          %v1571 = vadd.f32 %v1552, %v1555
          %v1572 = vadd.f32 %v1558, %v1561
          %v1573 = vadd.f32 %v1564, %v1567
          %v1574 = vadd.f32 %v1571, %v1572
          %v1575 = vadd.f32 %v1573, %v1570
          %v1576 = vadd.f32 %v1574, %v1575
          %v1578 = vlaneseq
          %v1579 = vshrl.u32 %v1578, 7
          %v1580 = vsub.s32 0, %v1579
          %v1581 = vrot.slane %v1576, %v1580
          %v1582 = vlaneseq
          %v1583 = vshrl.u32 %v1582, 7
          %v1584 = vsub.s32 1, %v1583
          %v1585 = vrot.slane %v1576, %v1584
          %1588 = vrot.lane.b32.xlu0 %v1581, 80
          %v1589 = vpop.permute.xlu0 %1588
          %1590 = vrot.lane.b32.xlu0 %v1585, 80
          %v1591 = vpop.permute.xlu0 %1590
          %v1592 = vsel %vm1016, %v1589, %v1591
          %v1593 = vsel %vm1016, %v1591, %v1589
          %v1596 = vcombine.low %v1592, %v1593
          %v1598 = vunpack.c.l.s4 1966171168
          %v1599 = vunpack.c.0.s8 %v1598
          %v1600 = vlaneseq
          %v1601 = vshrl.u32 %v1600, 7
          %v1602 = vsub.s32 %v1599, %v1601
          %v1603 = vrot.slane %v1596, %v1602
          %v1605 = vunpack.c.l.s4 1966171168
          %v1606 = vunpack.c.0.s8 %v1605
          %v1607 = vlaneseq
          %v1608 = vshrl.u32 %v1607, 7
          %v1609 = vsub.s32 %v1606, %v1608
          %v1610 = vrot.slane %v1603, %v1609
          %v1612 = vmul.f32 %v1000, %v1610
          %v1613 = vadd.f32 %v1269, %v1332
          %v1614 = vadd.f32 %v1395, %v1423
          %v1615 = vadd.f32 %v1486, %v1549
          %v1616 = vadd.f32 %v1613, %v1614
          %v1617 = vadd.f32 %v1615, %v1612
          %v1618 = vadd.f32 %v1616, %v1617
          %v1619 = vadd.f32 %v1043, %v1618
          %s1620 = sld [smem:[#allocation4]]
          %v1621 = vstv %s1620
          %v1622 = vadd.f32 %v1619, %v1621
          %v1623 = vxor.u32 %v1622, 2147483648
          %v1624 = vmul.f32 %v1623, 1.442695
          %v1625 = vpow.pop %v1624
          %v1626 = vadd.f32 %v1625, 1.0
          %v1627 = vrcp.pop %v1626
          %v1628 = vmul.f32 1.0, %v1627
          %v1629 = vlaneseq
          %vm1630 = vcmp.ge.s32.totalorder %v1629, 0
          %vm1631 = vcmp.lt.s32.totalorder %v1629, 256
          %vm1632 = vmand %vm1630, %vm1631
          %1633 = vst.msk [vmem:[%s296] sm:$0x3] %vm1632, %v1628
        $region68: #{tpu_custom_call.1} parent=39 // pred_fallthru
          _
        %s1634 = sand.u32 %s157, 1
        %s1635 = scalar_lea.sflag [#allocation7], %s1634
        %s1636 = sand.u32 %s157, 1
        %s1637 = smul.addr %s1636, 2
        %s1638 = scalar_lea.vmem [#allocation13], %s1637
        // Predicated region
        $region69: #{tpu_custom_call.1} parent=39 // pred_check
          %p1639 = pneg %p167
        $region70: #{tpu_custom_call.1} parent=39 // pred_check_branch
          %1641 = sbr.rel (%p1639) target = $region72
        $region71: #{tpu_custom_call.1} parent=39 // pred_region
          %s1643 = ssub.s32 32, 32
          %1644 = vsyncadd %s1635, %s1643
          %s1645 = smul.addr %s29, 2
          %s1646 = smul.addr %s1645, 16
          %s1647 = scalar_lea.hbm %s5, %s1646
          %s1649 = sshll.u32 %s1638, 4
          %s1650 = int_to_ptr.vmem [resolvable:$true] %s1649
          %1652 = dma.vmem_to_hbm [thread:$0]  %s1650, 32, %s1647, %s1635
        $region72: #{tpu_custom_call.1} parent=39 // pred_fallthru
          _
      $region40: #{tpu_custom_call.1} parent=5 // pred_fallthru
        _
      %p1653 = scmp.le.s32.totalorder 2, %s20
      // Predicated region
      $region73: #{tpu_custom_call.1} parent=5 // pred_check
        %p1654 = pneg %p1653
      $region74: #{tpu_custom_call.1} parent=5 // pred_check_branch
        %1656 = sbr.rel (%p1654) target = $region76
      $region75: #{tpu_custom_call.1} parent=5 // pred_region
        %s1657 = ssub.s32 %s20, 2
        // Predicated region
        $region77: #{tpu_custom_call.1} parent=75 // pred_check
          %p1658 = pneg %p173
        $region78: #{tpu_custom_call.1} parent=75 // pred_check_branch
          %1660 = sbr.rel (%p1658) target = $region80
        $region79: #{tpu_custom_call.1} parent=75 // pred_region
          %s1661 = sand.u32 %s158, 1
          %s1662 = scalar_lea.sflag [#allocation7], %s1661
          %s1663 = sand.u32 %s158, 1
          %s1664 = smul.addr %s1663, 2
          %s1665 = scalar_lea.vmem [#allocation13], %s1664
          %1666 = dma.done %s1662, 32
        $region80: #{tpu_custom_call.1} parent=75 // pred_fallthru
          _
      $region76: #{tpu_custom_call.1} parent=5 // pred_fallthru
        _
    $region6: #{tpu_custom_call.1} parent=1 // loop_footer
      %s24 = sadd.s32 1, %s20
    $region7: #{tpu_custom_call.1} parent=1 // loop_footer_branch
      %19 = sbr.rel target = $region3
    $region8: #{tpu_custom_call.1} parent=1 // loop_exit
      _
    %1667 = vsyncpa [#allocation6], 1
    %s1668 = scalar_lea.sflag [#allocation6], 1
    %1669 = vsyncpa %s1668, 1
    %1670 = vsyncpa [#allocation10], 1
    %1671 = vsyncpa [#allocation7], 1
    %s1672 = scalar_lea.sflag [#allocation7], 1
    %1673 = vsyncpa %s1672, 1
    %1674 = vsyncpa [#allocation8], 1
    %s1675 = scalar_lea.sflag [#allocation8], 1
    %1676 = vsyncpa %s1675, 1

</llo_original>
